<compile_context>
chip_gen: v7x
topology: tpu7x:2x2x1
jax: 0.10.0
libtpu: 0.0.40
codegen_flags: <defaults>
</compile_context>

<pallas_src>
import functools

import numpy as np
import jax
import jax.numpy as jnp
from jax.experimental import pallas as pl
from jax.experimental.pallas import tpu as pltpu


# ----------------------------------------------------------------------------
# Fused Critic kernel: all conv layers, one batch element per grid step
# ----------------------------------------------------------------------------
def _critic_fused_kernel(*refs, metas):
    """refs = [x, (Gt, W[, B]) per layer ..., out]."""
    x_ref = refs[0]
    idx = 1
    layer_refs = []
    for m in metas:
        gt_ref = refs[idx]
        w_ref = refs[idx + 1]
        idx += 2
        b_ref = None
        if m["bias"]:
            b_ref = refs[idx]
            idx += 1
        layer_refs.append((gt_ref, w_ref, b_ref))
    o_ref = refs[idx]
    assert idx + 1 == len(refs)

    act = x_ref[0]  # (Cin0, H0*W0) f32, lane-dense (spatial on lanes)

    for m, (gt_ref, w_ref, b_ref) in zip(metas, layer_refs):
        M, T, cin, cout = m["M"], m["T"], m["cin"], m["cout"]

        # im2col as one MXU matmul: (Cin, HW_in) @ (HW_in, T*M) -> (Cin, T*M).
        # Zero-padding of the conv is encoded as all-zero columns of Gt.
        gathered = jnp.dot(act, gt_ref[...], preferred_element_type=jnp.float32)

        # Relayout to (T*Cin, M): per-tap lane slices concatenated on sublanes
        # (row index = t*Cin + c, matching the host-side weight layout).
        patches = jnp.concatenate(
            [gathered[:, t * M:(t + 1) * M] for t in range(T)], axis=0)

        # Whole conv as a single contraction: (Cout, T*Cin) @ (T*Cin, M).
        acc = jnp.dot(w_ref[...], patches, preferred_element_type=jnp.float32)

        if b_ref is not None:
            acc = acc + b_ref[...]                            # (Cout, 1) broadcast
        if m["act"] is not None:
            acc = jnp.where(acc >= 0.0, acc, acc * m["act"])  # LeakyReLU(0.1), f32

        act = acc                                             # (Cout, M), stays on-chip

    o_ref[0] = act.astype(o_ref.dtype)                        # tiny final store


# ----------------------------------------------------------------------------
# Plan construction (static conv geometry -> gather matrices, weight layout)
# ----------------------------------------------------------------------------
def _gather_matrix_t(h, w, kh, kw, stride, pad, oh, ow):
    """0/1 matrix of shape (H*W, KH*KW*OH*OW): column (t*M + m) selects the
    input pixel feeding output position m at kernel tap t (all-zero column =
    conv zero-padding)."""
    m_total = oh * ow
    gt = np.zeros((h * w, kh * kw * m_total), np.float32)
    for ki in range(kh):
        for kj in range(kw):
            t = ki * kw + kj
            for r in range(oh):
                ih = r * stride - pad + ki
                if ih < 0 or ih >= h:
                    continue
                for c in range(ow):
                    iw = c * stride - pad + kj
                    if iw < 0 or iw >= w:
                        continue
                    gt[ih * w + iw, t * m_total + r * ow + c] = 1.0
    return gt


def make_critic_forward_pallas(params, image_size):
    """Returns a jitted forward(x_nchw) using one fused Pallas kernel."""
    h = w = int(image_size)
    metas, gt_mats, w_mats, biases = [], [], [], []

    for li, p in enumerate(params):
        cout, cin, kh, kw = (int(d) for d in p["w"].shape)
        s, pad = int(p["stride"]), int(p["pad"])
        oh = (h + 2 * pad - kh) // s + 1
        ow = (w + 2 * pad - kw) // s + 1
        m, t = oh * ow, kh * kw

        w_tensor = p["w"]
        if li == 0 and cin < 8:
            # Pad the (free) first-layer input channels with zeros so every
            # dot / sublane-concat operand has >= 8 sublanes.  Exact.
            w_tensor = jnp.pad(w_tensor, ((0, 0), (0, 8 - cin), (0, 0), (0, 0)))
            cin = 8

        gt_mats.append(jnp.asarray(_gather_matrix_t(h, w, kh, kw, s, pad, oh, ow)))
        # (Cout, Cin, KH, KW) -> (Cout, KH, KW, Cin) -> (Cout, T*Cin): column
        # index t*Cin + c matches the tap-major sublane order of `patches`.
        w_mats.append(
            jnp.transpose(w_tensor, (0, 2, 3, 1)).reshape(cout, t * cin)
            .astype(jnp.float32))
        biases.append(None if p["b"] is None
                      else p["b"].reshape(cout, 1).astype(jnp.float32))
        metas.append(dict(M=m, T=t, cin=cin, cout=cout, act=p["act"],
                          bias=p["b"] is not None, oh=oh, ow=ow))
        h, w = oh, ow

    hw0 = image_size * image_size
    cin0 = metas[0]["cin"]
    cin0_raw = int(params[0]["w"].shape[1])
    m_last, c_last = metas[-1]["M"], metas[-1]["cout"]
    oh_last, ow_last = metas[-1]["oh"], metas[-1]["ow"]

    def forward(x_nchw):
        n = x_nchw.shape[0]
        # NCHW maps directly onto the lane-dense (C, H*W) in-kernel layout.
        xf = x_nchw.reshape(n, cin0_raw, hw0)
        if cin0 > cin0_raw:
            xf = jnp.pad(xf, ((0, 0), (0, cin0 - cin0_raw), (0, 0)))

        operands = [xf]
        in_specs = [pl.BlockSpec((1, cin0, hw0), lambda b: (b, 0, 0))]
        for i, mt in enumerate(metas):
            # Constant index_maps: DMA'd into VMEM once, resident across grid.
            operands.append(gt_mats[i])
            in_specs.append(pl.BlockSpec(gt_mats[i].shape, lambda b: (0, 0)))
            operands.append(w_mats[i])
            in_specs.append(pl.BlockSpec(w_mats[i].shape, lambda b: (0, 0)))
            if mt["bias"]:
                operands.append(biases[i])
                in_specs.append(pl.BlockSpec(biases[i].shape, lambda b: (0, 0)))

        out = pl.pallas_call(
            functools.partial(_critic_fused_kernel, metas=metas),
            out_shape=jax.ShapeDtypeStruct((n, c_last, m_last), jnp.float32),
            grid=(n,),
            in_specs=in_specs,
            out_specs=pl.BlockSpec((1, c_last, m_last), lambda b: (b, 0, 0)),
            compiler_params=pltpu.CompilerParams(
                dimension_semantics=("parallel",),
                vmem_limit_bytes=32 * 1024 * 1024),
        )(*operands)

        # (N, C_last, OH*OW) -> NCHW directly (channels already leading).
        return out.reshape(n, c_last, oh_last, ow_last)

    return jax.jit(forward)


# ----------------------------------------------------------------------------
# Parameters (deterministic init) + spectral norm (one power iteration)
# ----------------------------------------------------------------------------
def spectral_normalize(w, key, n_iter=1, eps=1e-12):
    cout = w.shape[0]
    wm = w.reshape(cout, -1)
    u = jax.random.normal(key, (cout,), dtype=jnp.float32)
    u = u / (jnp.linalg.norm(u) + eps)
    v = None
    for _ in range(n_iter):
        v = wm.T @ u
        v = v / (jnp.linalg.norm(v) + eps)
        u = wm @ v
        u = u / (jnp.linalg.norm(u) + eps)
    sigma = u @ (wm @ v)
    return w / sigma


def init_critic_params(key, conv_dim=8, n_layers=3):
    specs = []
    cin, cout = 1, conv_dim
    for _ in range(n_layers):
        specs.append(dict(cin=cin, cout=cout, k=4, stride=2, pad=1, bias=True, act=0.1))
        cin, cout = cout, cout * 2
    # image_conv: 3x3, stride 1, pad 1, no bias, 1 output channel
    specs.append(dict(cin=cin, cout=1, k=3, stride=1, pad=1, bias=False, act=None))

    params = []
    for s in specs:
        key, wk, bk, uk = jax.random.split(key, 4)
        fan_in = s["cin"] * s["k"] * s["k"]
        w = jax.random.normal(
            wk, (s["cout"], s["cin"], s["k"], s["k"]), jnp.float32) / np.sqrt(fan_in)
        w = spectral_normalize(w, uk)
        b = (jax.random.normal(bk, (s["cout"],), jnp.float32) * 0.01) if s["bias"] else None
        params.append(dict(w=w, b=b, stride=s["stride"], pad=s["pad"], act=s["act"]))
    return params


# ----------------------------------------------------------------------------
# Pure-JAX reference
# ----------------------------------------------------------------------------
def critic_forward_ref(x_nchw, params):
    h = x_nchw
    for p in params:
        h = jax.lax.conv_general_dilated(
            h, p["w"], (p["stride"],) * 2, [(p["pad"], p["pad"])] * 2,
            dimension_numbers=("NCHW", "OIHW", "NCHW"))
        if p["b"] is not None:
            h = h + p["b"][None, :, None, None]
        if p["act"] is not None:
            h = jnp.where(h >= 0.0, h, h * p["act"])
    return h


if __name__ == "__main__":
    # Small instantiation consistent with Critic(image_size=16, conv_dim=8, n_layers=3):
    # input (2, 1, 16, 16) -> backbone -> (2, 32, 2, 2) -> image_conv -> (2, 1, 2, 2)
    key = jax.random.PRNGKey(0)
    key, xkey, pkey = jax.random.split(key, 3)
    x = jax.random.normal(xkey, (2, 1, 16, 16), jnp.float32)
    params = init_critic_params(pkey, conv_dim=8, n_layers=3)

    forward = make_critic_forward_pallas(params, image_size=16)
    out = jax.block_until_ready(forward(x))

    ref = jax.block_until_ready(critic_forward_ref(x, params))
    assert out.shape == (2, 1, 2, 2), out.shape
    np.testing.assert_allclose(np.asarray(out), np.asarray(ref), atol=2e-4, rtol=2e-4)

    print("KERNEL_OK")
</pallas_src>

<mosaic_0001>
module attributes {stable_mosaic.version = 11 : i64} {
  func.func @_critic_fused_kernel(%arg0: i32, %arg1: memref<1x8x256xf32, #tpu.memory_space<vmem>>, %arg2: memref<256x1024xf32, #tpu.memory_space<vmem>>, %arg3: memref<8x128xf32, #tpu.memory_space<vmem>>, %arg4: memref<8x1xf32, #tpu.memory_space<vmem>>, %arg5: memref<64x256xf32, #tpu.memory_space<vmem>>, %arg6: memref<16x128xf32, #tpu.memory_space<vmem>>, %arg7: memref<16x1xf32, #tpu.memory_space<vmem>>, %arg8: memref<16x64xf32, #tpu.memory_space<vmem>>, %arg9: memref<32x256xf32, #tpu.memory_space<vmem>>, %arg10: memref<32x1xf32, #tpu.memory_space<vmem>>, %arg11: memref<4x36xf32, #tpu.memory_space<vmem>>, %arg12: memref<1x288xf32, #tpu.memory_space<vmem>>, %arg13: memref<1x1x4xf32, #tpu.memory_space<vmem>>) attributes {dimension_semantics = [#tpu.dimension_semantics<parallel>], iteration_bounds = array<i64: 2>, scalar_prefetch = 0 : i64, scratch_operands = 0 : i64, tpu.core_type = #tpu.core_type<tc>, window_params = [{transform_indices = @transform_0, window_bounds = array<i64: 1, 8, 256>}, {pipeline_mode = #tpu.pipeline_mode<synchronous>, transform_indices = @transform_1, window_bounds = array<i64: 256, 1024>}, {pipeline_mode = #tpu.pipeline_mode<synchronous>, transform_indices = @transform_2, window_bounds = array<i64: 8, 128>}, {pipeline_mode = #tpu.pipeline_mode<synchronous>, transform_indices = @transform_3, window_bounds = array<i64: 8, 1>}, {pipeline_mode = #tpu.pipeline_mode<synchronous>, transform_indices = @transform_4, window_bounds = array<i64: 64, 256>}, {pipeline_mode = #tpu.pipeline_mode<synchronous>, transform_indices = @transform_5, window_bounds = array<i64: 16, 128>}, {pipeline_mode = #tpu.pipeline_mode<synchronous>, transform_indices = @transform_6, window_bounds = array<i64: 16, 1>}, {pipeline_mode = #tpu.pipeline_mode<synchronous>, transform_indices = @transform_7, window_bounds = array<i64: 16, 64>}, {pipeline_mode = #tpu.pipeline_mode<synchronous>, transform_indices = @transform_8, window_bounds = array<i64: 32, 256>}, {pipeline_mode = #tpu.pipeline_mode<synchronous>, transform_indices = @transform_9, window_bounds = array<i64: 32, 1>}, {pipeline_mode = #tpu.pipeline_mode<synchronous>, transform_indices = @transform_10, window_bounds = array<i64: 4, 36>}, {pipeline_mode = #tpu.pipeline_mode<synchronous>, transform_indices = @transform_11, window_bounds = array<i64: 1, 288>}, {transform_indices = @transform_12, window_bounds = array<i64: 1, 1, 4>}]} {
    %c0 = arith.constant 0 : index
    %c0_0 = arith.constant 0 : index
    %c0_1 = arith.constant 0 : index
    %0 = vector.load %arg1[%c0, %c0_0, %c0_1] : memref<1x8x256xf32, #tpu.memory_space<vmem>>, vector<1x8x256xf32>
    %1 = vector.shape_cast %0 : vector<1x8x256xf32> to vector<8x256xf32>
    %c0_2 = arith.constant 0 : index
    %c0_3 = arith.constant 0 : index
    %2 = vector.load %arg2[%c0_2, %c0_3] : memref<256x1024xf32, #tpu.memory_space<vmem>>, vector<256x1024xf32>
    %cst = arith.constant dense<0.000000e+00> : vector<8x1024xf32>
    %3 = tpu.matmul %1, %2, %cst {dimension_numbers = #tpu.dot_dimension_numbers<[1], [0], [0], [1], [0, 0, 1, 1], [], []>} : vector<8x256xf32>, vector<256x1024xf32>, vector<8x1024xf32> -> vector<8x1024xf32>
    %4 = vector.extract_strided_slice %3 {offsets = [0, 0], sizes = [8, 64], strides = [1, 1]} : vector<8x1024xf32> to vector<8x64xf32>
    %5 = vector.extract_strided_slice %3 {offsets = [0, 64], sizes = [8, 64], strides = [1, 1]} : vector<8x1024xf32> to vector<8x64xf32>
    %6 = vector.extract_strided_slice %3 {offsets = [0, 128], sizes = [8, 64], strides = [1, 1]} : vector<8x1024xf32> to vector<8x64xf32>
    %7 = vector.extract_strided_slice %3 {offsets = [0, 192], sizes = [8, 64], strides = [1, 1]} : vector<8x1024xf32> to vector<8x64xf32>
    %8 = vector.extract_strided_slice %3 {offsets = [0, 256], sizes = [8, 64], strides = [1, 1]} : vector<8x1024xf32> to vector<8x64xf32>
    %9 = vector.extract_strided_slice %3 {offsets = [0, 320], sizes = [8, 64], strides = [1, 1]} : vector<8x1024xf32> to vector<8x64xf32>
    %10 = vector.extract_strided_slice %3 {offsets = [0, 384], sizes = [8, 64], strides = [1, 1]} : vector<8x1024xf32> to vector<8x64xf32>
    %11 = vector.extract_strided_slice %3 {offsets = [0, 448], sizes = [8, 64], strides = [1, 1]} : vector<8x1024xf32> to vector<8x64xf32>
    %12 = vector.extract_strided_slice %3 {offsets = [0, 512], sizes = [8, 64], strides = [1, 1]} : vector<8x1024xf32> to vector<8x64xf32>
    %13 = vector.extract_strided_slice %3 {offsets = [0, 576], sizes = [8, 64], strides = [1, 1]} : vector<8x1024xf32> to vector<8x64xf32>
    %14 = vector.extract_strided_slice %3 {offsets = [0, 640], sizes = [8, 64], strides = [1, 1]} : vector<8x1024xf32> to vector<8x64xf32>
    %15 = vector.extract_strided_slice %3 {offsets = [0, 704], sizes = [8, 64], strides = [1, 1]} : vector<8x1024xf32> to vector<8x64xf32>
    %16 = vector.extract_strided_slice %3 {offsets = [0, 768], sizes = [8, 64], strides = [1, 1]} : vector<8x1024xf32> to vector<8x64xf32>
    %17 = vector.extract_strided_slice %3 {offsets = [0, 832], sizes = [8, 64], strides = [1, 1]} : vector<8x1024xf32> to vector<8x64xf32>
    %18 = vector.extract_strided_slice %3 {offsets = [0, 896], sizes = [8, 64], strides = [1, 1]} : vector<8x1024xf32> to vector<8x64xf32>
    %19 = vector.extract_strided_slice %3 {offsets = [0, 960], sizes = [8, 64], strides = [1, 1]} : vector<8x1024xf32> to vector<8x64xf32>
    %20 = tpu.concatenate %4, %5, %6, %7, %8, %9, %10, %11, %12, %13, %14, %15, %16, %17, %18, %19 in 0 : vector<8x64xf32>, vector<8x64xf32>, vector<8x64xf32>, vector<8x64xf32>, vector<8x64xf32>, vector<8x64xf32>, vector<8x64xf32>, vector<8x64xf32>, vector<8x64xf32>, vector<8x64xf32>, vector<8x64xf32>, vector<8x64xf32>, vector<8x64xf32>, vector<8x64xf32>, vector<8x64xf32>, vector<8x64xf32> -> vector<128x64xf32>
    %c0_4 = arith.constant 0 : index
    %c0_5 = arith.constant 0 : index
    %21 = vector.load %arg3[%c0_4, %c0_5] : memref<8x128xf32, #tpu.memory_space<vmem>>, vector<8x128xf32>
    %cst_6 = arith.constant dense<0.000000e+00> : vector<8x64xf32>
    %22 = tpu.matmul %21, %20, %cst_6 {dimension_numbers = #tpu.dot_dimension_numbers<[1], [0], [0], [1], [0, 0, 1, 1], [], []>} : vector<8x128xf32>, vector<128x64xf32>, vector<8x64xf32> -> vector<8x64xf32>
    %c0_7 = arith.constant 0 : index
    %c0_8 = arith.constant 0 : index
    %23 = vector.load %arg4[%c0_7, %c0_8] : memref<8x1xf32, #tpu.memory_space<vmem>>, vector<8x1xf32>
    %24 = vector.broadcast %23 : vector<8x1xf32> to vector<8x64xf32>
    %25 = arith.addf %22, %24 : vector<8x64xf32>
    %cst_9 = arith.constant 0.000000e+00 : f32
    %26 = vector.broadcast %cst_9 : f32 to vector<8x64xf32>
    %27 = arith.cmpf oge, %25, %26 : vector<8x64xf32>
    %cst_10 = arith.constant 1.000000e-01 : f32
    %28 = vector.broadcast %cst_10 : f32 to vector<8x64xf32>
    %29 = arith.mulf %25, %28 : vector<8x64xf32>
    %30 = arith.select %27, %25, %29 : vector<8x64xi1>, vector<8x64xf32>
    %c0_11 = arith.constant 0 : index
    %c0_12 = arith.constant 0 : index
    %31 = vector.load %arg5[%c0_11, %c0_12] : memref<64x256xf32, #tpu.memory_space<vmem>>, vector<64x256xf32>
    %cst_13 = arith.constant dense<0.000000e+00> : vector<8x256xf32>
    %32 = tpu.matmul %30, %31, %cst_13 {dimension_numbers = #tpu.dot_dimension_numbers<[1], [0], [0], [1], [0, 0, 1, 1], [], []>} : vector<8x64xf32>, vector<64x256xf32>, vector<8x256xf32> -> vector<8x256xf32>
    %33 = vector.extract_strided_slice %32 {offsets = [0, 0], sizes = [8, 16], strides = [1, 1]} : vector<8x256xf32> to vector<8x16xf32>
    %34 = vector.extract_strided_slice %32 {offsets = [0, 16], sizes = [8, 16], strides = [1, 1]} : vector<8x256xf32> to vector<8x16xf32>
    %35 = vector.extract_strided_slice %32 {offsets = [0, 32], sizes = [8, 16], strides = [1, 1]} : vector<8x256xf32> to vector<8x16xf32>
    %36 = vector.extract_strided_slice %32 {offsets = [0, 48], sizes = [8, 16], strides = [1, 1]} : vector<8x256xf32> to vector<8x16xf32>
    %37 = vector.extract_strided_slice %32 {offsets = [0, 64], sizes = [8, 16], strides = [1, 1]} : vector<8x256xf32> to vector<8x16xf32>
    %38 = vector.extract_strided_slice %32 {offsets = [0, 80], sizes = [8, 16], strides = [1, 1]} : vector<8x256xf32> to vector<8x16xf32>
    %39 = vector.extract_strided_slice %32 {offsets = [0, 96], sizes = [8, 16], strides = [1, 1]} : vector<8x256xf32> to vector<8x16xf32>
    %40 = vector.extract_strided_slice %32 {offsets = [0, 112], sizes = [8, 16], strides = [1, 1]} : vector<8x256xf32> to vector<8x16xf32>
    %41 = vector.extract_strided_slice %32 {offsets = [0, 128], sizes = [8, 16], strides = [1, 1]} : vector<8x256xf32> to vector<8x16xf32>
    %42 = vector.extract_strided_slice %32 {offsets = [0, 144], sizes = [8, 16], strides = [1, 1]} : vector<8x256xf32> to vector<8x16xf32>
    %43 = vector.extract_strided_slice %32 {offsets = [0, 160], sizes = [8, 16], strides = [1, 1]} : vector<8x256xf32> to vector<8x16xf32>
    %44 = vector.extract_strided_slice %32 {offsets = [0, 176], sizes = [8, 16], strides = [1, 1]} : vector<8x256xf32> to vector<8x16xf32>
    %45 = vector.extract_strided_slice %32 {offsets = [0, 192], sizes = [8, 16], strides = [1, 1]} : vector<8x256xf32> to vector<8x16xf32>
    %46 = vector.extract_strided_slice %32 {offsets = [0, 208], sizes = [8, 16], strides = [1, 1]} : vector<8x256xf32> to vector<8x16xf32>
    %47 = vector.extract_strided_slice %32 {offsets = [0, 224], sizes = [8, 16], strides = [1, 1]} : vector<8x256xf32> to vector<8x16xf32>
    %48 = vector.extract_strided_slice %32 {offsets = [0, 240], sizes = [8, 16], strides = [1, 1]} : vector<8x256xf32> to vector<8x16xf32>
    %49 = tpu.concatenate %33, %34, %35, %36, %37, %38, %39, %40, %41, %42, %43, %44, %45, %46, %47, %48 in 0 : vector<8x16xf32>, vector<8x16xf32>, vector<8x16xf32>, vector<8x16xf32>, vector<8x16xf32>, vector<8x16xf32>, vector<8x16xf32>, vector<8x16xf32>, vector<8x16xf32>, vector<8x16xf32>, vector<8x16xf32>, vector<8x16xf32>, vector<8x16xf32>, vector<8x16xf32>, vector<8x16xf32>, vector<8x16xf32> -> vector<128x16xf32>
    %c0_14 = arith.constant 0 : index
    %c0_15 = arith.constant 0 : index
    %50 = vector.load %arg6[%c0_14, %c0_15] : memref<16x128xf32, #tpu.memory_space<vmem>>, vector<16x128xf32>
    %cst_16 = arith.constant dense<0.000000e+00> : vector<16x16xf32>
    %51 = tpu.matmul %50, %49, %cst_16 {dimension_numbers = #tpu.dot_dimension_numbers<[1], [0], [0], [1], [0, 0, 1, 1], [], []>} : vector<16x128xf32>, vector<128x16xf32>, vector<16x16xf32> -> vector<16x16xf32>
    %c0_17 = arith.constant 0 : index
    %c0_18 = arith.constant 0 : index
    %52 = vector.load %arg7[%c0_17, %c0_18] : memref<16x1xf32, #tpu.memory_space<vmem>>, vector<16x1xf32>
    %53 = vector.broadcast %52 : vector<16x1xf32> to vector<16x16xf32>
    %54 = arith.addf %51, %53 : vector<16x16xf32>
    %cst_19 = arith.constant 0.000000e+00 : f32
    %55 = vector.broadcast %cst_19 : f32 to vector<16x16xf32>
    %56 = arith.cmpf oge, %54, %55 : vector<16x16xf32>
    %cst_20 = arith.constant 1.000000e-01 : f32
    %57 = vector.broadcast %cst_20 : f32 to vector<16x16xf32>
    %58 = arith.mulf %54, %57 : vector<16x16xf32>
    %59 = arith.select %56, %54, %58 : vector<16x16xi1>, vector<16x16xf32>
    %c0_21 = arith.constant 0 : index
    %c0_22 = arith.constant 0 : index
    %60 = vector.load %arg8[%c0_21, %c0_22] : memref<16x64xf32, #tpu.memory_space<vmem>>, vector<16x64xf32>
    %cst_23 = arith.constant dense<0.000000e+00> : vector<16x64xf32>
    %61 = tpu.matmul %59, %60, %cst_23 {dimension_numbers = #tpu.dot_dimension_numbers<[1], [0], [0], [1], [0, 0, 1, 1], [], []>} : vector<16x16xf32>, vector<16x64xf32>, vector<16x64xf32> -> vector<16x64xf32>
    %62 = vector.extract_strided_slice %61 {offsets = [0, 0], sizes = [16, 4], strides = [1, 1]} : vector<16x64xf32> to vector<16x4xf32>
    %63 = vector.extract_strided_slice %61 {offsets = [0, 4], sizes = [16, 4], strides = [1, 1]} : vector<16x64xf32> to vector<16x4xf32>
    %64 = vector.extract_strided_slice %61 {offsets = [0, 8], sizes = [16, 4], strides = [1, 1]} : vector<16x64xf32> to vector<16x4xf32>
    %65 = vector.extract_strided_slice %61 {offsets = [0, 12], sizes = [16, 4], strides = [1, 1]} : vector<16x64xf32> to vector<16x4xf32>
    %66 = vector.extract_strided_slice %61 {offsets = [0, 16], sizes = [16, 4], strides = [1, 1]} : vector<16x64xf32> to vector<16x4xf32>
    %67 = vector.extract_strided_slice %61 {offsets = [0, 20], sizes = [16, 4], strides = [1, 1]} : vector<16x64xf32> to vector<16x4xf32>
    %68 = vector.extract_strided_slice %61 {offsets = [0, 24], sizes = [16, 4], strides = [1, 1]} : vector<16x64xf32> to vector<16x4xf32>
    %69 = vector.extract_strided_slice %61 {offsets = [0, 28], sizes = [16, 4], strides = [1, 1]} : vector<16x64xf32> to vector<16x4xf32>
    %70 = vector.extract_strided_slice %61 {offsets = [0, 32], sizes = [16, 4], strides = [1, 1]} : vector<16x64xf32> to vector<16x4xf32>
    %71 = vector.extract_strided_slice %61 {offsets = [0, 36], sizes = [16, 4], strides = [1, 1]} : vector<16x64xf32> to vector<16x4xf32>
    %72 = vector.extract_strided_slice %61 {offsets = [0, 40], sizes = [16, 4], strides = [1, 1]} : vector<16x64xf32> to vector<16x4xf32>
    %73 = vector.extract_strided_slice %61 {offsets = [0, 44], sizes = [16, 4], strides = [1, 1]} : vector<16x64xf32> to vector<16x4xf32>
    %74 = vector.extract_strided_slice %61 {offsets = [0, 48], sizes = [16, 4], strides = [1, 1]} : vector<16x64xf32> to vector<16x4xf32>
    %75 = vector.extract_strided_slice %61 {offsets = [0, 52], sizes = [16, 4], strides = [1, 1]} : vector<16x64xf32> to vector<16x4xf32>
    %76 = vector.extract_strided_slice %61 {offsets = [0, 56], sizes = [16, 4], strides = [1, 1]} : vector<16x64xf32> to vector<16x4xf32>
    %77 = vector.extract_strided_slice %61 {offsets = [0, 60], sizes = [16, 4], strides = [1, 1]} : vector<16x64xf32> to vector<16x4xf32>
    %78 = tpu.concatenate %62, %63, %64, %65, %66, %67, %68, %69, %70, %71, %72, %73, %74, %75, %76, %77 in 0 : vector<16x4xf32>, vector<16x4xf32>, vector<16x4xf32>, vector<16x4xf32>, vector<16x4xf32>, vector<16x4xf32>, vector<16x4xf32>, vector<16x4xf32>, vector<16x4xf32>, vector<16x4xf32>, vector<16x4xf32>, vector<16x4xf32>, vector<16x4xf32>, vector<16x4xf32>, vector<16x4xf32>, vector<16x4xf32> -> vector<256x4xf32>
    %c0_24 = arith.constant 0 : index
    %c0_25 = arith.constant 0 : index
    %79 = vector.load %arg9[%c0_24, %c0_25] : memref<32x256xf32, #tpu.memory_space<vmem>>, vector<32x256xf32>
    %cst_26 = arith.constant dense<0.000000e+00> : vector<32x4xf32>
    %80 = tpu.matmul %79, %78, %cst_26 {dimension_numbers = #tpu.dot_dimension_numbers<[1], [0], [0], [1], [0, 0, 1, 1], [], []>} : vector<32x256xf32>, vector<256x4xf32>, vector<32x4xf32> -> vector<32x4xf32>
    %c0_27 = arith.constant 0 : index
    %c0_28 = arith.constant 0 : index
    %81 = vector.load %arg10[%c0_27, %c0_28] : memref<32x1xf32, #tpu.memory_space<vmem>>, vector<32x1xf32>
    %82 = vector.broadcast %81 : vector<32x1xf32> to vector<32x4xf32>
    %83 = arith.addf %80, %82 : vector<32x4xf32>
    %cst_29 = arith.constant 0.000000e+00 : f32
    %84 = vector.broadcast %cst_29 : f32 to vector<32x4xf32>
    %85 = arith.cmpf oge, %83, %84 : vector<32x4xf32>
    %cst_30 = arith.constant 1.000000e-01 : f32
    %86 = vector.broadcast %cst_30 : f32 to vector<32x4xf32>
    %87 = arith.mulf %83, %86 : vector<32x4xf32>
    %88 = arith.select %85, %83, %87 : vector<32x4xi1>, vector<32x4xf32>
    %c0_31 = arith.constant 0 : index
    %c0_32 = arith.constant 0 : index
    %89 = vector.load %arg11[%c0_31, %c0_32] : memref<4x36xf32, #tpu.memory_space<vmem>>, vector<4x36xf32>
    %cst_33 = arith.constant dense<0.000000e+00> : vector<32x36xf32>
    %90 = tpu.matmul %88, %89, %cst_33 {dimension_numbers = #tpu.dot_dimension_numbers<[1], [0], [0], [1], [0, 0, 1, 1], [], []>} : vector<32x4xf32>, vector<4x36xf32>, vector<32x36xf32> -> vector<32x36xf32>
    %91 = vector.extract_strided_slice %90 {offsets = [0, 0], sizes = [32, 4], strides = [1, 1]} : vector<32x36xf32> to vector<32x4xf32>
    %92 = vector.extract_strided_slice %90 {offsets = [0, 4], sizes = [32, 4], strides = [1, 1]} : vector<32x36xf32> to vector<32x4xf32>
    %93 = vector.extract_strided_slice %90 {offsets = [0, 8], sizes = [32, 4], strides = [1, 1]} : vector<32x36xf32> to vector<32x4xf32>
    %94 = vector.extract_strided_slice %90 {offsets = [0, 12], sizes = [32, 4], strides = [1, 1]} : vector<32x36xf32> to vector<32x4xf32>
    %95 = vector.extract_strided_slice %90 {offsets = [0, 16], sizes = [32, 4], strides = [1, 1]} : vector<32x36xf32> to vector<32x4xf32>
    %96 = vector.extract_strided_slice %90 {offsets = [0, 20], sizes = [32, 4], strides = [1, 1]} : vector<32x36xf32> to vector<32x4xf32>
    %97 = vector.extract_strided_slice %90 {offsets = [0, 24], sizes = [32, 4], strides = [1, 1]} : vector<32x36xf32> to vector<32x4xf32>
    %98 = vector.extract_strided_slice %90 {offsets = [0, 28], sizes = [32, 4], strides = [1, 1]} : vector<32x36xf32> to vector<32x4xf32>
    %99 = vector.extract_strided_slice %90 {offsets = [0, 32], sizes = [32, 4], strides = [1, 1]} : vector<32x36xf32> to vector<32x4xf32>
    %100 = tpu.concatenate %91, %92, %93, %94, %95, %96, %97, %98, %99 in 0 : vector<32x4xf32>, vector<32x4xf32>, vector<32x4xf32>, vector<32x4xf32>, vector<32x4xf32>, vector<32x4xf32>, vector<32x4xf32>, vector<32x4xf32>, vector<32x4xf32> -> vector<288x4xf32>
    %c0_34 = arith.constant 0 : index
    %c0_35 = arith.constant 0 : index
    %101 = vector.load %arg12[%c0_34, %c0_35] : memref<1x288xf32, #tpu.memory_space<vmem>>, vector<1x288xf32>
    %cst_36 = arith.constant dense<0.000000e+00> : vector<1x4xf32>
    %102 = tpu.matmul %101, %100, %cst_36 {dimension_numbers = #tpu.dot_dimension_numbers<[1], [0], [0], [1], [0, 0, 1, 1], [], []>} : vector<1x288xf32>, vector<288x4xf32>, vector<1x4xf32> -> vector<1x4xf32>
    %c0_37 = arith.constant 0 : index
    %c0_38 = arith.constant 0 : index
    %c0_39 = arith.constant 0 : index
    %103 = vector.load %arg13[%c0_37, %c0_38, %c0_39] : memref<1x1x4xf32, #tpu.memory_space<vmem>>, vector<1x1x4xf32>
    %104 = vector.shape_cast %103 : vector<1x1x4xf32> to vector<1x4xf32>
    %105 = vector.shape_cast %102 : vector<1x4xf32> to vector<1x1x4xf32>
    tpu.vector_store %arg13[%c0_37, %c0_38, %c0_39], %105 {strides = array<i32>} : memref<1x1x4xf32, #tpu.memory_space<vmem>>, vector<1x1x4xf32>,
    return
  }
  func.func @transform_0(%arg0: i32) -> (i32, i32, i32) {
    %c0_i32 = arith.constant 0 : i32
    %c0_i32_0 = arith.constant 0 : i32
    %c0_i32_1 = arith.constant 0 : i32
    return %arg0, %c0_i32, %c0_i32_0 : i32, i32, i32
  }
  func.func @transform_1(%arg0: i32) -> (i32, i32) {
    %c0_i32 = arith.constant 0 : i32
    %c0_i32_0 = arith.constant 0 : i32
    %c0_i32_1 = arith.constant 0 : i32
    return %c0_i32, %c0_i32_0 : i32, i32
  }
  func.func @transform_2(%arg0: i32) -> (i32, i32) {
    %c0_i32 = arith.constant 0 : i32
    %c0_i32_0 = arith.constant 0 : i32
    %c0_i32_1 = arith.constant 0 : i32
    return %c0_i32, %c0_i32_0 : i32, i32
  }
  func.func @transform_3(%arg0: i32) -> (i32, i32) {
    %c0_i32 = arith.constant 0 : i32
    %c0_i32_0 = arith.constant 0 : i32
    %c0_i32_1 = arith.constant 0 : i32
    return %c0_i32, %c0_i32_0 : i32, i32
  }
  func.func @transform_4(%arg0: i32) -> (i32, i32) {
    %c0_i32 = arith.constant 0 : i32
    %c0_i32_0 = arith.constant 0 : i32
    %c0_i32_1 = arith.constant 0 : i32
    return %c0_i32, %c0_i32_0 : i32, i32
  }
  func.func @transform_5(%arg0: i32) -> (i32, i32) {
    %c0_i32 = arith.constant 0 : i32
    %c0_i32_0 = arith.constant 0 : i32
    %c0_i32_1 = arith.constant 0 : i32
    return %c0_i32, %c0_i32_0 : i32, i32
  }
  func.func @transform_6(%arg0: i32) -> (i32, i32) {
    %c0_i32 = arith.constant 0 : i32
    %c0_i32_0 = arith.constant 0 : i32
    %c0_i32_1 = arith.constant 0 : i32
    return %c0_i32, %c0_i32_0 : i32, i32
  }
  func.func @transform_7(%arg0: i32) -> (i32, i32) {
    %c0_i32 = arith.constant 0 : i32
    %c0_i32_0 = arith.constant 0 : i32
    %c0_i32_1 = arith.constant 0 : i32
    return %c0_i32, %c0_i32_0 : i32, i32
  }
  func.func @transform_8(%arg0: i32) -> (i32, i32) {
    %c0_i32 = arith.constant 0 : i32
    %c0_i32_0 = arith.constant 0 : i32
    %c0_i32_1 = arith.constant 0 : i32
    return %c0_i32, %c0_i32_0 : i32, i32
  }
  func.func @transform_9(%arg0: i32) -> (i32, i32) {
    %c0_i32 = arith.constant 0 : i32
    %c0_i32_0 = arith.constant 0 : i32
    %c0_i32_1 = arith.constant 0 : i32
    return %c0_i32, %c0_i32_0 : i32, i32
  }
  func.func @transform_10(%arg0: i32) -> (i32, i32) {
    %c0_i32 = arith.constant 0 : i32
    %c0_i32_0 = arith.constant 0 : i32
    %c0_i32_1 = arith.constant 0 : i32
    return %c0_i32, %c0_i32_0 : i32, i32
  }
  func.func @transform_11(%arg0: i32) -> (i32, i32) {
    %c0_i32 = arith.constant 0 : i32
    %c0_i32_0 = arith.constant 0 : i32
    %c0_i32_1 = arith.constant 0 : i32
    return %c0_i32, %c0_i32_0 : i32, i32
  }
  func.func @transform_12(%arg0: i32) -> (i32, i32, i32) {
    %c0_i32 = arith.constant 0 : i32
    %c0_i32_0 = arith.constant 0 : i32
    %c0_i32_1 = arith.constant 0 : i32
    return %arg0, %c0_i32, %c0_i32_0 : i32, i32, i32
  }
}

</mosaic_0001>

<llo_original>
// kernel: forward.1
$region0: #{forward.1}
  #allocation0 [shape = 'u32[]', space=smem, size = 0x4, offset = 0x4, fixed_abs, tag = 'smem constant byte address 0x4 - core index']
  #allocation1 [shape = 'u32[144,128]{1,0:T(1,128)}', space=vmem, size = 0x12000, scoped, tag = 'internal scratch']
  %s0 = inlined_call_operand.vmem [shape: f32[2,8,256], index: 0, kind: input, shape index: {}]
  %s1 = inlined_call_operand.hbm [shape: f32[256,1024], index: 1, kind: input, shape index: {}]
  %s2 = inlined_call_operand.vmem [shape: f32[8,128], index: 2, kind: input, shape index: {}]
  %s3 = inlined_call_operand.hbm [shape: f32[8,1], index: 3, kind: input, shape index: {}]
  %s4 = inlined_call_operand.hbm [shape: f32[64,256], index: 4, kind: input, shape index: {}]
  %s5 = inlined_call_operand.vmem [shape: f32[16,128], index: 5, kind: input, shape index: {}]
  %s6 = inlined_call_operand.vmem [shape: f32[16,1], index: 6, kind: input, shape index: {}]
  %s7 = inlined_call_operand.hbm [shape: f32[16,64], index: 7, kind: input, shape index: {}]
  %s8 = inlined_call_operand.vmem [shape: f32[32,256], index: 8, kind: input, shape index: {}]
  %s9 = inlined_call_operand.hbm [shape: f32[32,1], index: 9, kind: input, shape index: {}]
  %s10 = inlined_call_operand.hbm [shape: f32[4,36], index: 10, kind: input, shape index: {}]
  %s11 = inlined_call_operand.vmem [shape: f32[1,288], index: 11, kind: input, shape index: {}]
  %s12 = inlined_call_operand.vmem [shape: f32[2,1,4], index: 12, kind: output, shape index: {}]
  %s13 = sld [smem:[#allocation0]]
  $region105: #{forward.1} parent=0
    _
  %s15 = ssub.s32 1, %s13
  %s16 = scalar_select 0, %s15, %s13
  $region1: #{forward.1} parent=0
    #allocation2 [shape = 'u8[1048576]{0}', space=vmem, size = 0x100000, scoped, tag = 'input window, operand 1, single buffered']
    #allocation3 [shape = 's32[2]{0}', space=sflag, size = 0x8, scoped, tag = 'scoped memory for forward.1']
    #allocation4 [shape = 'u8[4096]{0}', space=vmem, size = 0x1000, scoped, tag = 'input window, operand 3, single buffered']
    #allocation5 [shape = 's32[1]{0}', space=sflag, size = 0x4, scoped, tag = 'scoped memory for forward.1']
    #allocation6 [shape = 'u8[65536]{0}', space=vmem, size = 0x10000, scoped, tag = 'input window, operand 4, single buffered']
    #allocation7 [shape = 'u8[8192]{0}', space=vmem, size = 0x2000, scoped, tag = 'input window, operand 7, single buffered']
    #allocation8 [shape = 's32[1]{0}', space=sflag, size = 0x4, scoped, tag = 'scoped memory for forward.1']
    #allocation9 [shape = 'u8[16384]{0}', space=vmem, size = 0x4000, scoped, tag = 'input window, operand 9, single buffered']
    #allocation10 [shape = 'u8[2048]{0}', space=vmem, size = 0x800, scoped, tag = 'input window, operand 10, single buffered']
    #allocation11 [shape = 's32[1]{0}', space=sflag, size = 0x4, scoped, tag = 'scoped memory for forward.1']
    %17 = vsyncpa [#allocation3], 0
    %18 = vsyncpa [#allocation5], 0
    %19 = vsyncpa [#allocation8], 0
    %20 = vsyncpa [#allocation11], 0
    loop: start=0, step=1, limit=4
    $region2: #{forward.1} parent=1 // loop_pre_header
      _
    $region3: #{forward.1} parent=1 // loop_header
      %s22 = sphi 0, %s26
      %p23 = scmp.ge.s32.totalorder %s22, 4
      %s32 = sphi 0, %s34
      %s35 = sphi 0, %s32
      %s36 = sphi 0, %s35
      %s52 = sphi 0, %s36
      %s56 = sphi 0, %s56
      %s58 = sphi 0, %s56
      %s59 = sphi 0, %s58
      %s73 = sphi 0, %s59
      %s77 = sphi 0, %s77
      %s79 = sphi 0, %s77
      %s80 = sphi 0, %s79
      %s94 = sphi 0, %s80
      %s98 = sphi 0, %s98
      %s100 = sphi 0, %s98
      %s101 = sphi 0, %s100
      %s115 = sphi 0, %s101
      %s119 = sphi 0, %s119
      %s121 = sphi 0, %s119
      %s122 = sphi 0, %s121
      %s136 = sphi 0, %s122
      %s140 = sphi 0, %s140
      %s142 = sphi 0, %s140
      %s143 = sphi 0, %s142
      %s157 = sphi 0, %s143
      %s161 = sphi 0, %s161
      %s163 = sphi 0, %s161
      %s164 = sphi 0, %s163
      %s178 = sphi 0, %s164
      %s182 = sphi 0, %s182
      %s184 = sphi 0, %s182
      %s185 = sphi 0, %s184
      %s199 = sphi 0, %s185
      %s203 = sphi 0, %s203
      %s205 = sphi 0, %s203
      %s206 = sphi 0, %s205
      %s220 = sphi 0, %s206
      %s224 = sphi 0, %s224
      %s226 = sphi 0, %s224
      %s227 = sphi 0, %s226
      %s241 = sphi 0, %s227
      %s245 = sphi 0, %s245
      %s247 = sphi 0, %s245
      %s248 = sphi 0, %s247
      %s262 = sphi 0, %s248
      %s266 = sphi 0, %s266
      %s268 = sphi 0, %s266
      %s269 = sphi 0, %s268
      %s283 = sphi 0, %s269
      %s289 = sphi 0, %s291
      %s292 = sphi 0, %s289
      %s293 = sphi 0, %s292
      %s309 = sphi 0, %s293
    $region4: #{forward.1} parent=1 // loop_header_branch
      %25 = sbr.rel (%p23) target = $region8
    $region5: #{forward.1} parent=1 // loop_body
      %s27 = ssub.s32 %s22, 1
      %s28 = ssub.s32 %s22, 2
      %s29 = sadd.s32 %s22, 1
      %s30 = ssub.s32 %s22, %s29
      %p31 = scmp.eq.s32.totalorder %s30, 0
      %s33 = sadd.s32 %s32, 1
      %s34 = scalar_select %p31, %s32, %s33
      %p37 = pneg %p31
      %p38 = scmp.eq.s32.totalorder %s22, 1
      %p39 = por %p37, %p38
      %p40 = scmp.ne.s32.totalorder %s32, %s35
      %p41 = scmp.eq.s32.totalorder %s22, 0
      %p42 = por %p40, %p41
      %p43 = scmp.ne.s32.totalorder %s32, %s35
      %p44 = scmp.eq.s32.totalorder %s27, 1
      %p45 = por %p43, %p44
      %p46 = scmp.ne.s32.totalorder %s35, %s36
      %p47 = scmp.eq.s32.totalorder %s27, 0
      %p48 = por %p46, %p47
      %p49 = scmp.ne.s32.totalorder %s35, %s36
      %p50 = scmp.eq.s32.totalorder %s28, 1
      %p51 = por %p49, %p50
      %p53 = scmp.ne.s32.totalorder %s36, %s52
      %p54 = scmp.eq.s32.totalorder %s28, 0
      %p55 = por %p53, %p54
      %s57 = sadd.s32 %s56, 1
      %p60 = scmp.eq.s32.totalorder %s22, 1
      %p61 = scmp.ne.s32.totalorder %s56, %s58
      %p62 = scmp.eq.s32.totalorder %s22, 0
      %p63 = por %p61, %p62
      %p64 = scmp.ne.s32.totalorder %s56, %s58
      %p65 = scmp.eq.s32.totalorder %s27, 1
      %p66 = por %p64, %p65
      %p67 = scmp.ne.s32.totalorder %s58, %s59
      %p68 = scmp.eq.s32.totalorder %s27, 0
      %p69 = por %p67, %p68
      %p70 = scmp.ne.s32.totalorder %s58, %s59
      %p71 = scmp.eq.s32.totalorder %s28, 1
      %p72 = por %p70, %p71
      %p74 = scmp.ne.s32.totalorder %s59, %s73
      %p75 = scmp.eq.s32.totalorder %s28, 0
      %p76 = por %p74, %p75
      %s78 = sadd.s32 %s77, 1
      %p81 = scmp.eq.s32.totalorder %s22, 1
      %p82 = scmp.ne.s32.totalorder %s77, %s79
      %p83 = scmp.eq.s32.totalorder %s22, 0
      %p84 = por %p82, %p83
      %p85 = scmp.ne.s32.totalorder %s77, %s79
      %p86 = scmp.eq.s32.totalorder %s27, 1
      %p87 = por %p85, %p86
      %p88 = scmp.ne.s32.totalorder %s79, %s80
      %p89 = scmp.eq.s32.totalorder %s27, 0
      %p90 = por %p88, %p89
      %p91 = scmp.ne.s32.totalorder %s79, %s80
      %p92 = scmp.eq.s32.totalorder %s28, 1
      %p93 = por %p91, %p92
      %p95 = scmp.ne.s32.totalorder %s80, %s94
      %p96 = scmp.eq.s32.totalorder %s28, 0
      %p97 = por %p95, %p96
      %s99 = sadd.s32 %s98, 1
      %p102 = scmp.eq.s32.totalorder %s22, 1
      %p103 = scmp.ne.s32.totalorder %s98, %s100
      %p104 = scmp.eq.s32.totalorder %s22, 0
      %p105 = por %p103, %p104
      %p106 = scmp.ne.s32.totalorder %s98, %s100
      %p107 = scmp.eq.s32.totalorder %s27, 1
      %p108 = por %p106, %p107
      %p109 = scmp.ne.s32.totalorder %s100, %s101
      %p110 = scmp.eq.s32.totalorder %s27, 0
      %p111 = por %p109, %p110
      %p112 = scmp.ne.s32.totalorder %s100, %s101
      %p113 = scmp.eq.s32.totalorder %s28, 1
      %p114 = por %p112, %p113
      %p116 = scmp.ne.s32.totalorder %s101, %s115
      %p117 = scmp.eq.s32.totalorder %s28, 0
      %p118 = por %p116, %p117
      %s120 = sadd.s32 %s119, 1
      %p123 = scmp.eq.s32.totalorder %s22, 1
      %p124 = scmp.ne.s32.totalorder %s119, %s121
      %p125 = scmp.eq.s32.totalorder %s22, 0
      %p126 = por %p124, %p125
      %p127 = scmp.ne.s32.totalorder %s119, %s121
      %p128 = scmp.eq.s32.totalorder %s27, 1
      %p129 = por %p127, %p128
      %p130 = scmp.ne.s32.totalorder %s121, %s122
      %p131 = scmp.eq.s32.totalorder %s27, 0
      %p132 = por %p130, %p131
      %p133 = scmp.ne.s32.totalorder %s121, %s122
      %p134 = scmp.eq.s32.totalorder %s28, 1
      %p135 = por %p133, %p134
      %p137 = scmp.ne.s32.totalorder %s122, %s136
      %p138 = scmp.eq.s32.totalorder %s28, 0
      %p139 = por %p137, %p138
      %s141 = sadd.s32 %s140, 1
      %p144 = scmp.eq.s32.totalorder %s22, 1
      %p145 = scmp.ne.s32.totalorder %s140, %s142
      %p146 = scmp.eq.s32.totalorder %s22, 0
      %p147 = por %p145, %p146
      %p148 = scmp.ne.s32.totalorder %s140, %s142
      %p149 = scmp.eq.s32.totalorder %s27, 1
      %p150 = por %p148, %p149
      %p151 = scmp.ne.s32.totalorder %s142, %s143
      %p152 = scmp.eq.s32.totalorder %s27, 0
      %p153 = por %p151, %p152
      %p154 = scmp.ne.s32.totalorder %s142, %s143
      %p155 = scmp.eq.s32.totalorder %s28, 1
      %p156 = por %p154, %p155
      %p158 = scmp.ne.s32.totalorder %s143, %s157
      %p159 = scmp.eq.s32.totalorder %s28, 0
      %p160 = por %p158, %p159
      %s162 = sadd.s32 %s161, 1
      %p165 = scmp.eq.s32.totalorder %s22, 1
      %p166 = scmp.ne.s32.totalorder %s161, %s163
      %p167 = scmp.eq.s32.totalorder %s22, 0
      %p168 = por %p166, %p167
      %p169 = scmp.ne.s32.totalorder %s161, %s163
      %p170 = scmp.eq.s32.totalorder %s27, 1
      %p171 = por %p169, %p170
      %p172 = scmp.ne.s32.totalorder %s163, %s164
      %p173 = scmp.eq.s32.totalorder %s27, 0
      %p174 = por %p172, %p173
      %p175 = scmp.ne.s32.totalorder %s163, %s164
      %p176 = scmp.eq.s32.totalorder %s28, 1
      %p177 = por %p175, %p176
      %p179 = scmp.ne.s32.totalorder %s164, %s178
      %p180 = scmp.eq.s32.totalorder %s28, 0
      %p181 = por %p179, %p180
      %s183 = sadd.s32 %s182, 1
      %p186 = scmp.eq.s32.totalorder %s22, 1
      %p187 = scmp.ne.s32.totalorder %s182, %s184
      %p188 = scmp.eq.s32.totalorder %s22, 0
      %p189 = por %p187, %p188
      %p190 = scmp.ne.s32.totalorder %s182, %s184
      %p191 = scmp.eq.s32.totalorder %s27, 1
      %p192 = por %p190, %p191
      %p193 = scmp.ne.s32.totalorder %s184, %s185
      %p194 = scmp.eq.s32.totalorder %s27, 0
      %p195 = por %p193, %p194
      %p196 = scmp.ne.s32.totalorder %s184, %s185
      %p197 = scmp.eq.s32.totalorder %s28, 1
      %p198 = por %p196, %p197
      %p200 = scmp.ne.s32.totalorder %s185, %s199
      %p201 = scmp.eq.s32.totalorder %s28, 0
      %p202 = por %p200, %p201
      %s204 = sadd.s32 %s203, 1
      %p207 = scmp.eq.s32.totalorder %s22, 1
      %p208 = scmp.ne.s32.totalorder %s203, %s205
      %p209 = scmp.eq.s32.totalorder %s22, 0
      %p210 = por %p208, %p209
      %p211 = scmp.ne.s32.totalorder %s203, %s205
      %p212 = scmp.eq.s32.totalorder %s27, 1
      %p213 = por %p211, %p212
      %p214 = scmp.ne.s32.totalorder %s205, %s206
      %p215 = scmp.eq.s32.totalorder %s27, 0
      %p216 = por %p214, %p215
      %p217 = scmp.ne.s32.totalorder %s205, %s206
      %p218 = scmp.eq.s32.totalorder %s28, 1
      %p219 = por %p217, %p218
      %p221 = scmp.ne.s32.totalorder %s206, %s220
      %p222 = scmp.eq.s32.totalorder %s28, 0
      %p223 = por %p221, %p222
      %s225 = sadd.s32 %s224, 1
      %p228 = scmp.eq.s32.totalorder %s22, 1
      %p229 = scmp.ne.s32.totalorder %s224, %s226
      %p230 = scmp.eq.s32.totalorder %s22, 0
      %p231 = por %p229, %p230
      %p232 = scmp.ne.s32.totalorder %s224, %s226
      %p233 = scmp.eq.s32.totalorder %s27, 1
      %p234 = por %p232, %p233
      %p235 = scmp.ne.s32.totalorder %s226, %s227
      %p236 = scmp.eq.s32.totalorder %s27, 0
      %p237 = por %p235, %p236
      %p238 = scmp.ne.s32.totalorder %s226, %s227
      %p239 = scmp.eq.s32.totalorder %s28, 1
      %p240 = por %p238, %p239
      %p242 = scmp.ne.s32.totalorder %s227, %s241
      %p243 = scmp.eq.s32.totalorder %s28, 0
      %p244 = por %p242, %p243
      %s246 = sadd.s32 %s245, 1
      %p249 = scmp.eq.s32.totalorder %s22, 1
      %p250 = scmp.ne.s32.totalorder %s245, %s247
      %p251 = scmp.eq.s32.totalorder %s22, 0
      %p252 = por %p250, %p251
      %p253 = scmp.ne.s32.totalorder %s245, %s247
      %p254 = scmp.eq.s32.totalorder %s27, 1
      %p255 = por %p253, %p254
      %p256 = scmp.ne.s32.totalorder %s247, %s248
      %p257 = scmp.eq.s32.totalorder %s27, 0
      %p258 = por %p256, %p257
      %p259 = scmp.ne.s32.totalorder %s247, %s248
      %p260 = scmp.eq.s32.totalorder %s28, 1
      %p261 = por %p259, %p260
      %p263 = scmp.ne.s32.totalorder %s248, %s262
      %p264 = scmp.eq.s32.totalorder %s28, 0
      %p265 = por %p263, %p264
      %s267 = sadd.s32 %s266, 1
      %p270 = scmp.eq.s32.totalorder %s22, 1
      %p271 = scmp.ne.s32.totalorder %s266, %s268
      %p272 = scmp.eq.s32.totalorder %s22, 0
      %p273 = por %p271, %p272
      %p274 = scmp.ne.s32.totalorder %s266, %s268
      %p275 = scmp.eq.s32.totalorder %s27, 1
      %p276 = por %p274, %p275
      %p277 = scmp.ne.s32.totalorder %s268, %s269
      %p278 = scmp.eq.s32.totalorder %s27, 0
      %p279 = por %p277, %p278
      %p280 = scmp.ne.s32.totalorder %s268, %s269
      %p281 = scmp.eq.s32.totalorder %s28, 1
      %p282 = por %p280, %p281
      %p284 = scmp.ne.s32.totalorder %s269, %s283
      %p285 = scmp.eq.s32.totalorder %s28, 0
      %p286 = por %p284, %p285
      %s287 = ssub.s32 %s22, %s29
      %p288 = scmp.eq.s32.totalorder %s287, 0
      %s290 = sadd.s32 %s289, 1
      %s291 = scalar_select %p288, %s289, %s290
      %p294 = pneg %p288
      %p295 = scmp.eq.s32.totalorder %s22, 1
      %p296 = por %p294, %p295
      %p297 = scmp.ne.s32.totalorder %s289, %s292
      %p298 = scmp.eq.s32.totalorder %s22, 0
      %p299 = por %p297, %p298
      %p300 = scmp.ne.s32.totalorder %s289, %s292
      %p301 = scmp.eq.s32.totalorder %s27, 1
      %p302 = por %p300, %p301
      %p303 = scmp.ne.s32.totalorder %s292, %s293
      %p304 = scmp.eq.s32.totalorder %s27, 0
      %p305 = por %p303, %p304
      %p306 = scmp.ne.s32.totalorder %s292, %s293
      %p307 = scmp.eq.s32.totalorder %s28, 1
      %p308 = por %p306, %p307
      %p310 = scmp.ne.s32.totalorder %s293, %s309
      %p311 = scmp.eq.s32.totalorder %s28, 0
      %p312 = por %p310, %p311
      %p313 = scmp.le.s32.totalorder 1, %s22
      %p314 = scmp.lt.s32.totalorder %s22, 3
      %p315 = pnand %p313, %p314
      %p316 = pneg %p315
      // Predicated region
      $region9: #{forward.1} parent=5 // pred_check
        _
      $region10: #{forward.1} parent=5 // pred_check_branch
        %318 = sbr.rel (%p315) target = $region12
      $region11: #{forward.1} parent=5 // pred_region
        %s319 = ssub.s32 %s22, 1
        // Predicated region
        $region13: #{forward.1} parent=11 // pred_check
          %p320 = pneg %p69
        $region14: #{forward.1} parent=11 // pred_check_branch
          %322 = sbr.rel (%p320) target = $region16
        $region15: #{forward.1} parent=11 // pred_region
          %s324 = ssub.s32 32768, 32768
          %325 = vsyncadd [#allocation3], %s324
          %s326 = sshll.u32 [#allocation2], 4
          %s327 = int_to_ptr.vmem [resolvable:$true] %s326
          %332 = dma.hbm_to_vmem [thread:$0]  %s1, 32768, %s327, [#allocation3], 1024, 1024, 64
        $region16: #{forward.1} parent=11 // pred_fallthru
          _
        // Predicated region
        $region17: #{forward.1} parent=11 // pred_check
          %p333 = pneg %p90
        $region18: #{forward.1} parent=11 // pred_check_branch
          %335 = sbr.rel (%p333) target = $region20
        $region19: #{forward.1} parent=11 // pred_region
          _
        $region20: #{forward.1} parent=11 // pred_fallthru
          _
        // Predicated region
        $region21: #{forward.1} parent=11 // pred_check
          %p336 = pneg %p111
        $region22: #{forward.1} parent=11 // pred_check_branch
          %338 = sbr.rel (%p336) target = $region24
        $region23: #{forward.1} parent=11 // pred_region
          %s340 = ssub.s32 128, 128
          %341 = vsyncadd [#allocation5], %s340
          %s343 = sshll.u32 [#allocation4], 4
          %s344 = int_to_ptr.vmem [resolvable:$true] %s343
          %346 = dma.hbm_to_vmem [thread:$0]  %s3, 128, %s344, [#allocation5]
        $region24: #{forward.1} parent=11 // pred_fallthru
          _
        // Predicated region
        $region25: #{forward.1} parent=11 // pred_check
          %p347 = pneg %p132
        $region26: #{forward.1} parent=11 // pred_check_branch
          %349 = sbr.rel (%p347) target = $region28
        $region27: #{forward.1} parent=11 // pred_region
          %s351 = ssub.s32 2048, 2048
          %352 = vsyncadd [#allocation5], %s351
          %s353 = sshll.u32 [#allocation6], 4
          %s354 = int_to_ptr.vmem [resolvable:$true] %s353
          %359 = dma.hbm_to_vmem [thread:$0]  %s4, 2048, %s354, [#allocation5], 256, 256, 16
        $region28: #{forward.1} parent=11 // pred_fallthru
          _
        // Predicated region
        $region29: #{forward.1} parent=11 // pred_check
          %p360 = pneg %p153
        $region30: #{forward.1} parent=11 // pred_check_branch
          %362 = sbr.rel (%p360) target = $region32
        $region31: #{forward.1} parent=11 // pred_region
          _
        $region32: #{forward.1} parent=11 // pred_fallthru
          _
        // Predicated region
        $region33: #{forward.1} parent=11 // pred_check
          %p363 = pneg %p174
        $region34: #{forward.1} parent=11 // pred_check_branch
          %365 = sbr.rel (%p363) target = $region36
        $region35: #{forward.1} parent=11 // pred_region
          _
        $region36: #{forward.1} parent=11 // pred_fallthru
          _
        // Predicated region
        $region37: #{forward.1} parent=11 // pred_check
          %p366 = pneg %p195
        $region38: #{forward.1} parent=11 // pred_check_branch
          %368 = sbr.rel (%p366) target = $region40
        $region39: #{forward.1} parent=11 // pred_region
          %s370 = ssub.s32 256, 256
          %371 = vsyncadd [#allocation8], %s370
          %s372 = sshll.u32 [#allocation7], 4
          %s373 = int_to_ptr.vmem [resolvable:$true] %s372
          %378 = dma.hbm_to_vmem [thread:$0]  %s7, 256, %s373, [#allocation8], 128, 128, 8
        $region40: #{forward.1} parent=11 // pred_fallthru
          _
        // Predicated region
        $region41: #{forward.1} parent=11 // pred_check
          %p379 = pneg %p216
        $region42: #{forward.1} parent=11 // pred_check_branch
          %381 = sbr.rel (%p379) target = $region44
        $region43: #{forward.1} parent=11 // pred_region
          _
        $region44: #{forward.1} parent=11 // pred_fallthru
          _
        // Predicated region
        $region45: #{forward.1} parent=11 // pred_check
          %p382 = pneg %p237
        $region46: #{forward.1} parent=11 // pred_check_branch
          %384 = sbr.rel (%p382) target = $region48
        $region47: #{forward.1} parent=11 // pred_region
          %s386 = ssub.s32 512, 512
          %387 = vsyncadd [#allocation8], %s386
          %s388 = sshll.u32 [#allocation9], 4
          %s389 = int_to_ptr.vmem [resolvable:$true] %s388
          %394 = dma.hbm_to_vmem [thread:$0]  %s9, 512, %s389, [#allocation8], 128, 128, 8
        $region48: #{forward.1} parent=11 // pred_fallthru
          _
        // Predicated region
        $region49: #{forward.1} parent=11 // pred_check
          %p395 = pneg %p258
        $region50: #{forward.1} parent=11 // pred_check_branch
          %397 = sbr.rel (%p395) target = $region52
        $region51: #{forward.1} parent=11 // pred_region
          %s399 = ssub.s32 64, 64
          %400 = vsyncadd [#allocation11], %s399
          %s402 = sshll.u32 [#allocation10], 4
          %s403 = int_to_ptr.vmem [resolvable:$true] %s402
          %405 = dma.hbm_to_vmem [thread:$0]  %s10, 64, %s403, [#allocation11]
        $region52: #{forward.1} parent=11 // pred_fallthru
          _
        // Predicated region
        $region53: #{forward.1} parent=11 // pred_check
          %p406 = pneg %p279
        $region54: #{forward.1} parent=11 // pred_check_branch
          %408 = sbr.rel (%p406) target = $region56
        $region55: #{forward.1} parent=11 // pred_region
          _
        $region56: #{forward.1} parent=11 // pred_fallthru
          _
      $region12: #{forward.1} parent=5 // pred_fallthru
        _
      %p409 = scmp.lt.s32.totalorder %s22, 2
      // Predicated region
      $region57: #{forward.1} parent=5 // pred_check
        %p410 = pneg %p409
      $region58: #{forward.1} parent=5 // pred_check_branch
        %412 = sbr.rel (%p410) target = $region60
      $region59: #{forward.1} parent=5 // pred_region
        // Predicated region
        $region61: #{forward.1} parent=59 // pred_check
          %p413 = pneg %p42
        $region62: #{forward.1} parent=59 // pred_check_branch
          %415 = sbr.rel (%p413) target = $region64
        $region63: #{forward.1} parent=59 // pred_region
          %p416 = scmp.lt.s32.totalorder %s22, 1
          %s417 = scalar_select %p416, %s22, 1
          %s418 = smul.addr %s417, 2
          %s419 = smul.addr %s418, 8
          %s420 = scalar_lea.vmem %s0, %s419
        $region64: #{forward.1} parent=59 // pred_fallthru
          _
      $region60: #{forward.1} parent=5 // pred_fallthru
        _
      %p421 = scmp.le.s32.totalorder 1, %s22
      %p422 = scmp.lt.s32.totalorder %s22, 3
      %p423 = pnand %p421, %p422
      %p424 = pneg %p423
      // Predicated region
      $region65: #{forward.1} parent=5 // pred_check
        _
      $region66: #{forward.1} parent=5 // pred_check_branch
        %426 = sbr.rel (%p423) target = $region68
      $region67: #{forward.1} parent=5 // pred_region
        %s427 = ssub.s32 %s22, 1
        // Predicated region
        $region69: #{forward.1} parent=67 // pred_check
          %p428 = pneg %p69
        $region70: #{forward.1} parent=67 // pred_check_branch
          %430 = sbr.rel (%p428) target = $region72
        $region71: #{forward.1} parent=67 // pred_region
          %431 = dma.done [#allocation3], 32768
        $region72: #{forward.1} parent=67 // pred_fallthru
          _
        // Predicated region
        $region73: #{forward.1} parent=67 // pred_check
          %p432 = pneg %p111
        $region74: #{forward.1} parent=67 // pred_check_branch
          %434 = sbr.rel (%p432) target = $region76
        $region75: #{forward.1} parent=67 // pred_region
          %435 = dma.done [#allocation5], 128
        $region76: #{forward.1} parent=67 // pred_fallthru
          _
        // Predicated region
        $region77: #{forward.1} parent=67 // pred_check
          %p436 = pneg %p132
        $region78: #{forward.1} parent=67 // pred_check_branch
          %438 = sbr.rel (%p436) target = $region80
        $region79: #{forward.1} parent=67 // pred_region
          %439 = dma.done [#allocation5], 2048
        $region80: #{forward.1} parent=67 // pred_fallthru
          _
        // Predicated region
        $region81: #{forward.1} parent=67 // pred_check
          %p440 = pneg %p195
        $region82: #{forward.1} parent=67 // pred_check_branch
          %442 = sbr.rel (%p440) target = $region84
        $region83: #{forward.1} parent=67 // pred_region
          %443 = dma.done [#allocation8], 256
        $region84: #{forward.1} parent=67 // pred_fallthru
          _
        // Predicated region
        $region85: #{forward.1} parent=67 // pred_check
          %p444 = pneg %p237
        $region86: #{forward.1} parent=67 // pred_check_branch
          %446 = sbr.rel (%p444) target = $region88
        $region87: #{forward.1} parent=67 // pred_region
          %447 = dma.done [#allocation8], 512
        $region88: #{forward.1} parent=67 // pred_fallthru
          _
        // Predicated region
        $region89: #{forward.1} parent=67 // pred_check
          %p448 = pneg %p258
        $region90: #{forward.1} parent=67 // pred_check_branch
          %450 = sbr.rel (%p448) target = $region92
        $region91: #{forward.1} parent=67 // pred_region
          %451 = dma.done [#allocation11], 64
        $region92: #{forward.1} parent=67 // pred_fallthru
          _
        %p452 = scmp.lt.s32.totalorder %s27, 1
        %s453 = scalar_select %p452, %s27, 1
        %s454 = smul.addr %s453, 2
        %s455 = smul.addr %s454, 8
        %s456 = scalar_lea.vmem %s0, %s455
        %p457 = pneg %p48
        %p458 = pneg %p45
        %p459 = pneg %p69
        %p460 = pneg %p66
        %p461 = pneg %p90
        %p462 = pneg %p87
        %p463 = pneg %p111
        %p464 = pneg %p108
        %p465 = pneg %p132
        %p466 = pneg %p129
        %p467 = pneg %p153
        %p468 = pneg %p150
        %p469 = pneg %p174
        %p470 = pneg %p171
        %p471 = pneg %p195
        %p472 = pneg %p192
        %p473 = pneg %p216
        %p474 = pneg %p213
        %p475 = pneg %p237
        %p476 = pneg %p234
        %p477 = pneg %p258
        %p478 = pneg %p255
        %p479 = pneg %p279
        %p480 = pneg %p276
        %p481 = pneg %p305
        %p482 = pneg %p302
        %p483 = scmp.lt.s32.totalorder %s27, 1
        %s484 = scalar_select %p483, %s27, 1
        %s485 = scalar_lea.vmem %s12, %s484
        %p486 = scmp.lt.s32.totalorder %s27, 1
        %s487 = scalar_select %p486, %s27, 1
        %s488 = smul.addr %s487, 2
        %s489 = smul.addr %s488, 8
        %s490 = scalar_lea.vmem %s0, %s489
        %p491 = scmp.lt.s32.totalorder %s27, 1
        %s492 = scalar_select %p491, %s27, 1
        %s493 = scalar_lea.vmem %s12, %s492
        %v494 = vld [vmem:[%s490] sm:$0xff]
        %v495 = vld [vmem:[%s490 + $0x8] sm:$0xff]
        %v496 = vld [vmem:[#allocation2] sm:$0xff]
        %v497 = vld [vmem:[#allocation2 + $0x8] sm:$0xff]
        %v498 = vld [vmem:[#allocation2 + $0x10] sm:$0xff]
        %v499 = vld [vmem:[#allocation2 + $0x18] sm:$0xff]
        %v500 = vld [vmem:[#allocation2 + $0x20] sm:$0xff]
        %v501 = vld [vmem:[#allocation2 + $0x28] sm:$0xff]
        %v502 = vld [vmem:[#allocation2 + $0x30] sm:$0xff]
        %v503 = vld [vmem:[#allocation2 + $0x38] sm:$0xff]
        %v504 = vld [vmem:[#allocation2 + $0x40] sm:$0xff]
        %v505 = vld [vmem:[#allocation2 + $0x48] sm:$0xff]
        %v506 = vld [vmem:[#allocation2 + $0x50] sm:$0xff]
        %v507 = vld [vmem:[#allocation2 + $0x58] sm:$0xff]
        %v508 = vld [vmem:[#allocation2 + $0x60] sm:$0xff]
        %v509 = vld [vmem:[#allocation2 + $0x68] sm:$0xff]
        %v510 = vld [vmem:[#allocation2 + $0x70] sm:$0xff]
        %v511 = vld [vmem:[#allocation2 + $0x78] sm:$0xff]
        %v512 = vld [vmem:[#allocation2 + $0x80] sm:$0xff]
        %v513 = vld [vmem:[#allocation2 + $0x88] sm:$0xff]
        %v514 = vld [vmem:[#allocation2 + $0x90] sm:$0xff]
        %v515 = vld [vmem:[#allocation2 + $0x98] sm:$0xff]
        %v516 = vld [vmem:[#allocation2 + $0xa0] sm:$0xff]
        %v517 = vld [vmem:[#allocation2 + $0xa8] sm:$0xff]
        %v518 = vld [vmem:[#allocation2 + $0xb0] sm:$0xff]
        %v519 = vld [vmem:[#allocation2 + $0xb8] sm:$0xff]
        %v520 = vld [vmem:[#allocation2 + $0xc0] sm:$0xff]
        %v521 = vld [vmem:[#allocation2 + $0xc8] sm:$0xff]
        %v522 = vld [vmem:[#allocation2 + $0xd0] sm:$0xff]
        %v523 = vld [vmem:[#allocation2 + $0xd8] sm:$0xff]
        %v524 = vld [vmem:[#allocation2 + $0xe0] sm:$0xff]
        %v525 = vld [vmem:[#allocation2 + $0xe8] sm:$0xff]
        %v526 = vld [vmem:[#allocation2 + $0xf0] sm:$0xff]
        %v527 = vld [vmem:[#allocation2 + $0xf8] sm:$0xff]
        %v528 = vld [vmem:[#allocation2 + $0x100] sm:$0xff]
        %v529 = vld [vmem:[#allocation2 + $0x108] sm:$0xff]
        %v530 = vld [vmem:[#allocation2 + $0x110] sm:$0xff]
        %v531 = vld [vmem:[#allocation2 + $0x118] sm:$0xff]
        %v532 = vld [vmem:[#allocation2 + $0x120] sm:$0xff]
        %v533 = vld [vmem:[#allocation2 + $0x128] sm:$0xff]
        %v534 = vld [vmem:[#allocation2 + $0x130] sm:$0xff]
        %v535 = vld [vmem:[#allocation2 + $0x138] sm:$0xff]
        %v536 = vld [vmem:[#allocation2 + $0x140] sm:$0xff]
        %v537 = vld [vmem:[#allocation2 + $0x148] sm:$0xff]
        %v538 = vld [vmem:[#allocation2 + $0x150] sm:$0xff]
        %v539 = vld [vmem:[#allocation2 + $0x158] sm:$0xff]
        %v540 = vld [vmem:[#allocation2 + $0x160] sm:$0xff]
        %v541 = vld [vmem:[#allocation2 + $0x168] sm:$0xff]
        %v542 = vld [vmem:[#allocation2 + $0x170] sm:$0xff]
        %v543 = vld [vmem:[#allocation2 + $0x178] sm:$0xff]
        %v544 = vld [vmem:[#allocation2 + $0x180] sm:$0xff]
        %v545 = vld [vmem:[#allocation2 + $0x188] sm:$0xff]
        %v546 = vld [vmem:[#allocation2 + $0x190] sm:$0xff]
        %v547 = vld [vmem:[#allocation2 + $0x198] sm:$0xff]
        %v548 = vld [vmem:[#allocation2 + $0x1a0] sm:$0xff]
        %v549 = vld [vmem:[#allocation2 + $0x1a8] sm:$0xff]
        %v550 = vld [vmem:[#allocation2 + $0x1b0] sm:$0xff]
        %v551 = vld [vmem:[#allocation2 + $0x1b8] sm:$0xff]
        %v552 = vld [vmem:[#allocation2 + $0x1c0] sm:$0xff]
        %v553 = vld [vmem:[#allocation2 + $0x1c8] sm:$0xff]
        %v554 = vld [vmem:[#allocation2 + $0x1d0] sm:$0xff]
        %v555 = vld [vmem:[#allocation2 + $0x1d8] sm:$0xff]
        %v556 = vld [vmem:[#allocation2 + $0x1e0] sm:$0xff]
        %v557 = vld [vmem:[#allocation2 + $0x1e8] sm:$0xff]
        %v558 = vld [vmem:[#allocation2 + $0x1f0] sm:$0xff]
        %v559 = vld [vmem:[#allocation2 + $0x1f8] sm:$0xff]
        %v560 = vld [vmem:[#allocation2 + $0x200] sm:$0xff]
        %v561 = vld [vmem:[#allocation2 + $0x208] sm:$0xff]
        %v562 = vld [vmem:[#allocation2 + $0x210] sm:$0xff]
        %v563 = vld [vmem:[#allocation2 + $0x218] sm:$0xff]
        %v564 = vld [vmem:[#allocation2 + $0x220] sm:$0xff]
        %v565 = vld [vmem:[#allocation2 + $0x228] sm:$0xff]
        %v566 = vld [vmem:[#allocation2 + $0x230] sm:$0xff]
        %v567 = vld [vmem:[#allocation2 + $0x238] sm:$0xff]
        %v568 = vld [vmem:[#allocation2 + $0x240] sm:$0xff]
        %v569 = vld [vmem:[#allocation2 + $0x248] sm:$0xff]
        %v570 = vld [vmem:[#allocation2 + $0x250] sm:$0xff]
        %v571 = vld [vmem:[#allocation2 + $0x258] sm:$0xff]
        %v572 = vld [vmem:[#allocation2 + $0x260] sm:$0xff]
        %v573 = vld [vmem:[#allocation2 + $0x268] sm:$0xff]
        %v574 = vld [vmem:[#allocation2 + $0x270] sm:$0xff]
        %v575 = vld [vmem:[#allocation2 + $0x278] sm:$0xff]
        %v576 = vld [vmem:[#allocation2 + $0x280] sm:$0xff]
        %v577 = vld [vmem:[#allocation2 + $0x288] sm:$0xff]
        %v578 = vld [vmem:[#allocation2 + $0x290] sm:$0xff]
        %v579 = vld [vmem:[#allocation2 + $0x298] sm:$0xff]
        %v580 = vld [vmem:[#allocation2 + $0x2a0] sm:$0xff]
        %v581 = vld [vmem:[#allocation2 + $0x2a8] sm:$0xff]
        %v582 = vld [vmem:[#allocation2 + $0x2b0] sm:$0xff]
        %v583 = vld [vmem:[#allocation2 + $0x2b8] sm:$0xff]
        %v584 = vld [vmem:[#allocation2 + $0x2c0] sm:$0xff]
        %v585 = vld [vmem:[#allocation2 + $0x2c8] sm:$0xff]
        %v586 = vld [vmem:[#allocation2 + $0x2d0] sm:$0xff]
        %v587 = vld [vmem:[#allocation2 + $0x2d8] sm:$0xff]
        %v588 = vld [vmem:[#allocation2 + $0x2e0] sm:$0xff]
        %v589 = vld [vmem:[#allocation2 + $0x2e8] sm:$0xff]
        %v590 = vld [vmem:[#allocation2 + $0x2f0] sm:$0xff]
        %v591 = vld [vmem:[#allocation2 + $0x2f8] sm:$0xff]
        %v592 = vld [vmem:[#allocation2 + $0x300] sm:$0xff]
        %v593 = vld [vmem:[#allocation2 + $0x308] sm:$0xff]
        %v594 = vld [vmem:[#allocation2 + $0x310] sm:$0xff]
        %v595 = vld [vmem:[#allocation2 + $0x318] sm:$0xff]
        %v596 = vld [vmem:[#allocation2 + $0x320] sm:$0xff]
        %v597 = vld [vmem:[#allocation2 + $0x328] sm:$0xff]
        %v598 = vld [vmem:[#allocation2 + $0x330] sm:$0xff]
        %v599 = vld [vmem:[#allocation2 + $0x338] sm:$0xff]
        %v600 = vld [vmem:[#allocation2 + $0x340] sm:$0xff]
        %v601 = vld [vmem:[#allocation2 + $0x348] sm:$0xff]
        %v602 = vld [vmem:[#allocation2 + $0x350] sm:$0xff]
        %v603 = vld [vmem:[#allocation2 + $0x358] sm:$0xff]
        %v604 = vld [vmem:[#allocation2 + $0x360] sm:$0xff]
        %v605 = vld [vmem:[#allocation2 + $0x368] sm:$0xff]
        %v606 = vld [vmem:[#allocation2 + $0x370] sm:$0xff]
        %v607 = vld [vmem:[#allocation2 + $0x378] sm:$0xff]
        %v608 = vld [vmem:[#allocation2 + $0x380] sm:$0xff]
        %v609 = vld [vmem:[#allocation2 + $0x388] sm:$0xff]
        %v610 = vld [vmem:[#allocation2 + $0x390] sm:$0xff]
        %v611 = vld [vmem:[#allocation2 + $0x398] sm:$0xff]
        %v612 = vld [vmem:[#allocation2 + $0x3a0] sm:$0xff]
        %v613 = vld [vmem:[#allocation2 + $0x3a8] sm:$0xff]
        %v614 = vld [vmem:[#allocation2 + $0x3b0] sm:$0xff]
        %v615 = vld [vmem:[#allocation2 + $0x3b8] sm:$0xff]
        %v616 = vld [vmem:[#allocation2 + $0x3c0] sm:$0xff]
        %v617 = vld [vmem:[#allocation2 + $0x3c8] sm:$0xff]
        %v618 = vld [vmem:[#allocation2 + $0x3d0] sm:$0xff]
        %v619 = vld [vmem:[#allocation2 + $0x3d8] sm:$0xff]
        %v620 = vld [vmem:[#allocation2 + $0x3e0] sm:$0xff]
        %v621 = vld [vmem:[#allocation2 + $0x3e8] sm:$0xff]
        %v622 = vld [vmem:[#allocation2 + $0x3f0] sm:$0xff]
        %v623 = vld [vmem:[#allocation2 + $0x3f8] sm:$0xff]
        %v624 = vld [vmem:[#allocation2 + $0x400] sm:$0xff]
        %v625 = vld [vmem:[#allocation2 + $0x408] sm:$0xff]
        %v626 = vld [vmem:[#allocation2 + $0x410] sm:$0xff]
        %v627 = vld [vmem:[#allocation2 + $0x418] sm:$0xff]
        %v628 = vld [vmem:[#allocation2 + $0x420] sm:$0xff]
        %v629 = vld [vmem:[#allocation2 + $0x428] sm:$0xff]
        %v630 = vld [vmem:[#allocation2 + $0x430] sm:$0xff]
        %v631 = vld [vmem:[#allocation2 + $0x438] sm:$0xff]
        %v632 = vld [vmem:[#allocation2 + $0x440] sm:$0xff]
        %v633 = vld [vmem:[#allocation2 + $0x448] sm:$0xff]
        %v634 = vld [vmem:[#allocation2 + $0x450] sm:$0xff]
        %v635 = vld [vmem:[#allocation2 + $0x458] sm:$0xff]
        %v636 = vld [vmem:[#allocation2 + $0x460] sm:$0xff]
        %v637 = vld [vmem:[#allocation2 + $0x468] sm:$0xff]
        %v638 = vld [vmem:[#allocation2 + $0x470] sm:$0xff]
        %v639 = vld [vmem:[#allocation2 + $0x478] sm:$0xff]
        %v640 = vld [vmem:[#allocation2 + $0x480] sm:$0xff]
        %v641 = vld [vmem:[#allocation2 + $0x488] sm:$0xff]
        %v642 = vld [vmem:[#allocation2 + $0x490] sm:$0xff]
        %v643 = vld [vmem:[#allocation2 + $0x498] sm:$0xff]
        %v644 = vld [vmem:[#allocation2 + $0x4a0] sm:$0xff]
        %v645 = vld [vmem:[#allocation2 + $0x4a8] sm:$0xff]
        %v646 = vld [vmem:[#allocation2 + $0x4b0] sm:$0xff]
        %v647 = vld [vmem:[#allocation2 + $0x4b8] sm:$0xff]
        %v648 = vld [vmem:[#allocation2 + $0x4c0] sm:$0xff]
        %v649 = vld [vmem:[#allocation2 + $0x4c8] sm:$0xff]
        %v650 = vld [vmem:[#allocation2 + $0x4d0] sm:$0xff]
        %v651 = vld [vmem:[#allocation2 + $0x4d8] sm:$0xff]
        %v652 = vld [vmem:[#allocation2 + $0x4e0] sm:$0xff]
        %v653 = vld [vmem:[#allocation2 + $0x4e8] sm:$0xff]
        %v654 = vld [vmem:[#allocation2 + $0x4f0] sm:$0xff]
        %v655 = vld [vmem:[#allocation2 + $0x4f8] sm:$0xff]
        %v656 = vld [vmem:[#allocation2 + $0x500] sm:$0xff]
        %v657 = vld [vmem:[#allocation2 + $0x508] sm:$0xff]
        %v658 = vld [vmem:[#allocation2 + $0x510] sm:$0xff]
        %v659 = vld [vmem:[#allocation2 + $0x518] sm:$0xff]
        %v660 = vld [vmem:[#allocation2 + $0x520] sm:$0xff]
        %v661 = vld [vmem:[#allocation2 + $0x528] sm:$0xff]
        %v662 = vld [vmem:[#allocation2 + $0x530] sm:$0xff]
        %v663 = vld [vmem:[#allocation2 + $0x538] sm:$0xff]
        %v664 = vld [vmem:[#allocation2 + $0x540] sm:$0xff]
        %v665 = vld [vmem:[#allocation2 + $0x548] sm:$0xff]
        %v666 = vld [vmem:[#allocation2 + $0x550] sm:$0xff]
        %v667 = vld [vmem:[#allocation2 + $0x558] sm:$0xff]
        %v668 = vld [vmem:[#allocation2 + $0x560] sm:$0xff]
        %v669 = vld [vmem:[#allocation2 + $0x568] sm:$0xff]
        %v670 = vld [vmem:[#allocation2 + $0x570] sm:$0xff]
        %v671 = vld [vmem:[#allocation2 + $0x578] sm:$0xff]
        %v672 = vld [vmem:[#allocation2 + $0x580] sm:$0xff]
        %v673 = vld [vmem:[#allocation2 + $0x588] sm:$0xff]
        %v674 = vld [vmem:[#allocation2 + $0x590] sm:$0xff]
        %v675 = vld [vmem:[#allocation2 + $0x598] sm:$0xff]
        %v676 = vld [vmem:[#allocation2 + $0x5a0] sm:$0xff]
        %v677 = vld [vmem:[#allocation2 + $0x5a8] sm:$0xff]
        %v678 = vld [vmem:[#allocation2 + $0x5b0] sm:$0xff]
        %v679 = vld [vmem:[#allocation2 + $0x5b8] sm:$0xff]
        %v680 = vld [vmem:[#allocation2 + $0x5c0] sm:$0xff]
        %v681 = vld [vmem:[#allocation2 + $0x5c8] sm:$0xff]
        %v682 = vld [vmem:[#allocation2 + $0x5d0] sm:$0xff]
        %v683 = vld [vmem:[#allocation2 + $0x5d8] sm:$0xff]
        %v684 = vld [vmem:[#allocation2 + $0x5e0] sm:$0xff]
        %v685 = vld [vmem:[#allocation2 + $0x5e8] sm:$0xff]
        %v686 = vld [vmem:[#allocation2 + $0x5f0] sm:$0xff]
        %v687 = vld [vmem:[#allocation2 + $0x5f8] sm:$0xff]
        %v688 = vld [vmem:[#allocation2 + $0x600] sm:$0xff]
        %v689 = vld [vmem:[#allocation2 + $0x608] sm:$0xff]
        %v690 = vld [vmem:[#allocation2 + $0x610] sm:$0xff]
        %v691 = vld [vmem:[#allocation2 + $0x618] sm:$0xff]
        %v692 = vld [vmem:[#allocation2 + $0x620] sm:$0xff]
        %v693 = vld [vmem:[#allocation2 + $0x628] sm:$0xff]
        %v694 = vld [vmem:[#allocation2 + $0x630] sm:$0xff]
        %v695 = vld [vmem:[#allocation2 + $0x638] sm:$0xff]
        %v696 = vld [vmem:[#allocation2 + $0x640] sm:$0xff]
        %v697 = vld [vmem:[#allocation2 + $0x648] sm:$0xff]
        %v698 = vld [vmem:[#allocation2 + $0x650] sm:$0xff]
        %v699 = vld [vmem:[#allocation2 + $0x658] sm:$0xff]
        %v700 = vld [vmem:[#allocation2 + $0x660] sm:$0xff]
        %v701 = vld [vmem:[#allocation2 + $0x668] sm:$0xff]
        %v702 = vld [vmem:[#allocation2 + $0x670] sm:$0xff]
        %v703 = vld [vmem:[#allocation2 + $0x678] sm:$0xff]
        %v704 = vld [vmem:[#allocation2 + $0x680] sm:$0xff]
        %v705 = vld [vmem:[#allocation2 + $0x688] sm:$0xff]
        %v706 = vld [vmem:[#allocation2 + $0x690] sm:$0xff]
        %v707 = vld [vmem:[#allocation2 + $0x698] sm:$0xff]
        %v708 = vld [vmem:[#allocation2 + $0x6a0] sm:$0xff]
        %v709 = vld [vmem:[#allocation2 + $0x6a8] sm:$0xff]
        %v710 = vld [vmem:[#allocation2 + $0x6b0] sm:$0xff]
        %v711 = vld [vmem:[#allocation2 + $0x6b8] sm:$0xff]
        %v712 = vld [vmem:[#allocation2 + $0x6c0] sm:$0xff]
        %v713 = vld [vmem:[#allocation2 + $0x6c8] sm:$0xff]
        %v714 = vld [vmem:[#allocation2 + $0x6d0] sm:$0xff]
        %v715 = vld [vmem:[#allocation2 + $0x6d8] sm:$0xff]
        %v716 = vld [vmem:[#allocation2 + $0x6e0] sm:$0xff]
        %v717 = vld [vmem:[#allocation2 + $0x6e8] sm:$0xff]
        %v718 = vld [vmem:[#allocation2 + $0x6f0] sm:$0xff]
        %v719 = vld [vmem:[#allocation2 + $0x6f8] sm:$0xff]
        %v720 = vld [vmem:[#allocation2 + $0x700] sm:$0xff]
        %v721 = vld [vmem:[#allocation2 + $0x708] sm:$0xff]
        %v722 = vld [vmem:[#allocation2 + $0x710] sm:$0xff]
        %v723 = vld [vmem:[#allocation2 + $0x718] sm:$0xff]
        %v724 = vld [vmem:[#allocation2 + $0x720] sm:$0xff]
        %v725 = vld [vmem:[#allocation2 + $0x728] sm:$0xff]
        %v726 = vld [vmem:[#allocation2 + $0x730] sm:$0xff]
        %v727 = vld [vmem:[#allocation2 + $0x738] sm:$0xff]
        %v728 = vld [vmem:[#allocation2 + $0x740] sm:$0xff]
        %v729 = vld [vmem:[#allocation2 + $0x748] sm:$0xff]
        %v730 = vld [vmem:[#allocation2 + $0x750] sm:$0xff]
        %v731 = vld [vmem:[#allocation2 + $0x758] sm:$0xff]
        %v732 = vld [vmem:[#allocation2 + $0x760] sm:$0xff]
        %v733 = vld [vmem:[#allocation2 + $0x768] sm:$0xff]
        %v734 = vld [vmem:[#allocation2 + $0x770] sm:$0xff]
        %v735 = vld [vmem:[#allocation2 + $0x778] sm:$0xff]
        %v736 = vld [vmem:[#allocation2 + $0x780] sm:$0xff]
        %v737 = vld [vmem:[#allocation2 + $0x788] sm:$0xff]
        %v738 = vld [vmem:[#allocation2 + $0x790] sm:$0xff]
        %v739 = vld [vmem:[#allocation2 + $0x798] sm:$0xff]
        %v740 = vld [vmem:[#allocation2 + $0x7a0] sm:$0xff]
        %v741 = vld [vmem:[#allocation2 + $0x7a8] sm:$0xff]
        %v742 = vld [vmem:[#allocation2 + $0x7b0] sm:$0xff]
        %v743 = vld [vmem:[#allocation2 + $0x7b8] sm:$0xff]
        %v744 = vld [vmem:[#allocation2 + $0x7c0] sm:$0xff]
        %v745 = vld [vmem:[#allocation2 + $0x7c8] sm:$0xff]
        %v746 = vld [vmem:[#allocation2 + $0x7d0] sm:$0xff]
        %v747 = vld [vmem:[#allocation2 + $0x7d8] sm:$0xff]
        %v748 = vld [vmem:[#allocation2 + $0x7e0] sm:$0xff]
        %v749 = vld [vmem:[#allocation2 + $0x7e8] sm:$0xff]
        %v750 = vld [vmem:[#allocation2 + $0x7f0] sm:$0xff]
        %v751 = vld [vmem:[#allocation2 + $0x7f8] sm:$0xff]
        %752 = vmatprep.subr.mxu0 %v497
        %753 = vmatpush1.msra.mxu0 %v496
        %754 = vmatprep.subr.mxu0 %v505
        %755 = vmatpush1.msra.mxu0 %v504
        %756 = vmatprep.subr.mxu0 %v513
        %757 = vmatpush1.msra.mxu0 %v512
        %758 = vmatprep.subr.mxu0 %v521
        %759 = vmatpush1.msra.mxu0 %v520
        %760 = vmatprep.subr.mxu0 %v529
        %761 = vmatpush1.msra.mxu0 %v528
        %762 = vmatprep.subr.mxu0 %v537
        %763 = vmatpush1.msra.mxu0 %v536
        %764 = vmatprep.subr.mxu0 %v545
        %765 = vmatpush1.msra.mxu0 %v544
        %766 = vmatprep.subr.mxu0 %v553
        %767 = vmatpush1.msra.mxu0 %v552
        %768 = vmatprep.subr.mxu0 %v561
        %769 = vmatpush1.msra.mxu0 %v560
        %770 = vmatprep.subr.mxu0 %v569
        %771 = vmatpush1.msra.mxu0 %v568
        %772 = vmatprep.subr.mxu0 %v577
        %773 = vmatpush1.msra.mxu0 %v576
        %774 = vmatprep.subr.mxu0 %v585
        %775 = vmatpush1.msra.mxu0 %v584
        %776 = vmatprep.subr.mxu0 %v593
        %777 = vmatpush1.msra.mxu0 %v592
        %778 = vmatprep.subr.mxu0 %v601
        %779 = vmatpush1.msra.mxu0 %v600
        %780 = vmatprep.subr.mxu0 %v609
        %781 = vmatpush1.msra.mxu0 %v608
        %782 = vmatprep.subr.mxu0 %v617
        %783 = vmatpush1.msra.mxu0 %v616
        %784 = vmatprep.subr.mxu0 %v625
        %785 = vmatpush1.msra.mxu0 %v624
        %786 = vmatprep.subr.mxu0 %v633
        %787 = vmatpush1.msra.mxu0 %v632
        %788 = vmatprep.subr.mxu0 %v641
        %789 = vmatpush1.msra.mxu0 %v640
        %790 = vmatprep.subr.mxu0 %v649
        %791 = vmatpush1.msra.mxu0 %v648
        %792 = vmatprep.subr.mxu0 %v657
        %793 = vmatpush1.msra.mxu0 %v656
        %794 = vmatprep.subr.mxu0 %v665
        %795 = vmatpush1.msra.mxu0 %v664
        %796 = vmatprep.subr.mxu0 %v673
        %797 = vmatpush1.msra.mxu0 %v672
        %798 = vmatprep.subr.mxu0 %v681
        %799 = vmatpush1.msra.mxu0 %v680
        %800 = vmatprep.subr.mxu0 %v689
        %801 = vmatpush1.msra.mxu0 %v688
        %802 = vmatprep.subr.mxu0 %v697
        %803 = vmatpush1.msra.mxu0 %v696
        %804 = vmatprep.subr.mxu0 %v705
        %805 = vmatpush1.msra.mxu0 %v704
        %806 = vmatprep.subr.mxu0 %v713
        %807 = vmatpush1.msra.mxu0 %v712
        %808 = vmatprep.subr.mxu0 %v721
        %809 = vmatpush1.msra.mxu0 %v720
        %810 = vmatprep.subr.mxu0 %v729
        %811 = vmatpush1.msra.mxu0 %v728
        %812 = vmatprep.subr.mxu0 %v737
        %813 = vmatpush1.msra.mxu0 %v736
        %814 = vmatprep.subr.mxu0 %v745
        %815 = vmatpush1.msra.mxu0 %v744
        %816 = vmatprep.mubr.f32.mxu0 %v495
        %817 = vmatmul.mubr.f32.gmra.mrb[0].mxu0 %v494
        %v818 = vpop.f32.mrb[0].mxu0
        %v819 = vadd.f32 0.0, %v818
        %v820 = vpop.f32.mrb[0].mxu0
        %v821 = vadd.f32 0.0, %v820
        %822 = vdwg.mxu0
        %823 = vmatprep.subr.mxu0 %v499
        %824 = vmatpush1.msra.mxu0 %v498
        %825 = vmatprep.subr.mxu0 %v507
        %826 = vmatpush1.msra.mxu0 %v506
        %827 = vmatprep.subr.mxu0 %v515
        %828 = vmatpush1.msra.mxu0 %v514
        %829 = vmatprep.subr.mxu0 %v523
        %830 = vmatpush1.msra.mxu0 %v522
        %831 = vmatprep.subr.mxu0 %v531
        %832 = vmatpush1.msra.mxu0 %v530
        %833 = vmatprep.subr.mxu0 %v539
        %834 = vmatpush1.msra.mxu0 %v538
        %835 = vmatprep.subr.mxu0 %v547
        %836 = vmatpush1.msra.mxu0 %v546
        %837 = vmatprep.subr.mxu0 %v555
        %838 = vmatpush1.msra.mxu0 %v554
        %839 = vmatprep.subr.mxu0 %v563
        %840 = vmatpush1.msra.mxu0 %v562
        %841 = vmatprep.subr.mxu0 %v571
        %842 = vmatpush1.msra.mxu0 %v570
        %843 = vmatprep.subr.mxu0 %v579
        %844 = vmatpush1.msra.mxu0 %v578
        %845 = vmatprep.subr.mxu0 %v587
        %846 = vmatpush1.msra.mxu0 %v586
        %847 = vmatprep.subr.mxu0 %v595
        %848 = vmatpush1.msra.mxu0 %v594
        %849 = vmatprep.subr.mxu0 %v603
        %850 = vmatpush1.msra.mxu0 %v602
        %851 = vmatprep.subr.mxu0 %v611
        %852 = vmatpush1.msra.mxu0 %v610
        %853 = vmatprep.subr.mxu0 %v619
        %854 = vmatpush1.msra.mxu0 %v618
        %855 = vmatprep.subr.mxu0 %v627
        %856 = vmatpush1.msra.mxu0 %v626
        %857 = vmatprep.subr.mxu0 %v635
        %858 = vmatpush1.msra.mxu0 %v634
        %859 = vmatprep.subr.mxu0 %v643
        %860 = vmatpush1.msra.mxu0 %v642
        %861 = vmatprep.subr.mxu0 %v651
        %862 = vmatpush1.msra.mxu0 %v650
        %863 = vmatprep.subr.mxu0 %v659
        %864 = vmatpush1.msra.mxu0 %v658
        %865 = vmatprep.subr.mxu0 %v667
        %866 = vmatpush1.msra.mxu0 %v666
        %867 = vmatprep.subr.mxu0 %v675
        %868 = vmatpush1.msra.mxu0 %v674
        %869 = vmatprep.subr.mxu0 %v683
        %870 = vmatpush1.msra.mxu0 %v682
        %871 = vmatprep.subr.mxu0 %v691
        %872 = vmatpush1.msra.mxu0 %v690
        %873 = vmatprep.subr.mxu0 %v699
        %874 = vmatpush1.msra.mxu0 %v698
        %875 = vmatprep.subr.mxu0 %v707
        %876 = vmatpush1.msra.mxu0 %v706
        %877 = vmatprep.subr.mxu0 %v715
        %878 = vmatpush1.msra.mxu0 %v714
        %879 = vmatprep.subr.mxu0 %v723
        %880 = vmatpush1.msra.mxu0 %v722
        %881 = vmatprep.subr.mxu0 %v731
        %882 = vmatpush1.msra.mxu0 %v730
        %883 = vmatprep.subr.mxu0 %v739
        %884 = vmatpush1.msra.mxu0 %v738
        %885 = vmatprep.subr.mxu0 %v747
        %886 = vmatpush1.msra.mxu0 %v746
        %887 = vmatprep.mubr.f32.mxu0 %v495
        %888 = vmatmul.mubr.f32.gmra.mrb[0].mxu0 %v494
        %v889 = vpop.f32.mrb[0].mxu0
        %v890 = vadd.f32 0.0, %v889
        %v891 = vpop.f32.mrb[0].mxu0
        %v892 = vadd.f32 0.0, %v891
        %893 = vdwg.mxu0
        %894 = vmatprep.subr.mxu0 %v501
        %895 = vmatpush1.msra.mxu0 %v500
        %896 = vmatprep.subr.mxu0 %v509
        %897 = vmatpush1.msra.mxu0 %v508
        %898 = vmatprep.subr.mxu0 %v517
        %899 = vmatpush1.msra.mxu0 %v516
        %900 = vmatprep.subr.mxu0 %v525
        %901 = vmatpush1.msra.mxu0 %v524
        %902 = vmatprep.subr.mxu0 %v533
        %903 = vmatpush1.msra.mxu0 %v532
        %904 = vmatprep.subr.mxu0 %v541
        %905 = vmatpush1.msra.mxu0 %v540
        %906 = vmatprep.subr.mxu0 %v549
        %907 = vmatpush1.msra.mxu0 %v548
        %908 = vmatprep.subr.mxu0 %v557
        %909 = vmatpush1.msra.mxu0 %v556
        %910 = vmatprep.subr.mxu0 %v565
        %911 = vmatpush1.msra.mxu0 %v564
        %912 = vmatprep.subr.mxu0 %v573
        %913 = vmatpush1.msra.mxu0 %v572
        %914 = vmatprep.subr.mxu0 %v581
        %915 = vmatpush1.msra.mxu0 %v580
        %916 = vmatprep.subr.mxu0 %v589
        %917 = vmatpush1.msra.mxu0 %v588
        %918 = vmatprep.subr.mxu0 %v597
        %919 = vmatpush1.msra.mxu0 %v596
        %920 = vmatprep.subr.mxu0 %v605
        %921 = vmatpush1.msra.mxu0 %v604
        %922 = vmatprep.subr.mxu0 %v613
        %923 = vmatpush1.msra.mxu0 %v612
        %924 = vmatprep.subr.mxu0 %v621
        %925 = vmatpush1.msra.mxu0 %v620
        %926 = vmatprep.subr.mxu0 %v629
        %927 = vmatpush1.msra.mxu0 %v628
        %928 = vmatprep.subr.mxu0 %v637
        %929 = vmatpush1.msra.mxu0 %v636
        %930 = vmatprep.subr.mxu0 %v645
        %931 = vmatpush1.msra.mxu0 %v644
        %932 = vmatprep.subr.mxu0 %v653
        %933 = vmatpush1.msra.mxu0 %v652
        %934 = vmatprep.subr.mxu0 %v661
        %935 = vmatpush1.msra.mxu0 %v660
        %936 = vmatprep.subr.mxu0 %v669
        %937 = vmatpush1.msra.mxu0 %v668
        %938 = vmatprep.subr.mxu0 %v677
        %939 = vmatpush1.msra.mxu0 %v676
        %940 = vmatprep.subr.mxu0 %v685
        %941 = vmatpush1.msra.mxu0 %v684
        %942 = vmatprep.subr.mxu0 %v693
        %943 = vmatpush1.msra.mxu0 %v692
        %944 = vmatprep.subr.mxu0 %v701
        %945 = vmatpush1.msra.mxu0 %v700
        %946 = vmatprep.subr.mxu0 %v709
        %947 = vmatpush1.msra.mxu0 %v708
        %948 = vmatprep.subr.mxu0 %v717
        %949 = vmatpush1.msra.mxu0 %v716
        %950 = vmatprep.subr.mxu0 %v725
        %951 = vmatpush1.msra.mxu0 %v724
        %952 = vmatprep.subr.mxu0 %v733
        %953 = vmatpush1.msra.mxu0 %v732
        %954 = vmatprep.subr.mxu0 %v741
        %955 = vmatpush1.msra.mxu0 %v740
        %956 = vmatprep.subr.mxu0 %v749
        %957 = vmatpush1.msra.mxu0 %v748
        %958 = vmatprep.mubr.f32.mxu0 %v495
        %959 = vmatmul.mubr.f32.gmra.mrb[0].mxu0 %v494
        %v960 = vpop.f32.mrb[0].mxu0
        %v961 = vadd.f32 0.0, %v960
        %v962 = vpop.f32.mrb[0].mxu0
        %v963 = vadd.f32 0.0, %v962
        %964 = vdwg.mxu0
        %965 = vmatprep.subr.mxu0 %v503
        %966 = vmatpush1.msra.mxu0 %v502
        %967 = vmatprep.subr.mxu0 %v511
        %968 = vmatpush1.msra.mxu0 %v510
        %969 = vmatprep.subr.mxu0 %v519
        %970 = vmatpush1.msra.mxu0 %v518
        %971 = vmatprep.subr.mxu0 %v527
        %972 = vmatpush1.msra.mxu0 %v526
        %973 = vmatprep.subr.mxu0 %v535
        %974 = vmatpush1.msra.mxu0 %v534
        %975 = vmatprep.subr.mxu0 %v543
        %976 = vmatpush1.msra.mxu0 %v542
        %977 = vmatprep.subr.mxu0 %v551
        %978 = vmatpush1.msra.mxu0 %v550
        %979 = vmatprep.subr.mxu0 %v559
        %980 = vmatpush1.msra.mxu0 %v558
        %981 = vmatprep.subr.mxu0 %v567
        %982 = vmatpush1.msra.mxu0 %v566
        %983 = vmatprep.subr.mxu0 %v575
        %984 = vmatpush1.msra.mxu0 %v574
        %985 = vmatprep.subr.mxu0 %v583
        %986 = vmatpush1.msra.mxu0 %v582
        %987 = vmatprep.subr.mxu0 %v591
        %988 = vmatpush1.msra.mxu0 %v590
        %989 = vmatprep.subr.mxu0 %v599
        %990 = vmatpush1.msra.mxu0 %v598
        %991 = vmatprep.subr.mxu0 %v607
        %992 = vmatpush1.msra.mxu0 %v606
        %993 = vmatprep.subr.mxu0 %v615
        %994 = vmatpush1.msra.mxu0 %v614
        %995 = vmatprep.subr.mxu0 %v623
        %996 = vmatpush1.msra.mxu0 %v622
        %997 = vmatprep.subr.mxu0 %v631
        %998 = vmatpush1.msra.mxu0 %v630
        %999 = vmatprep.subr.mxu0 %v639
        %1000 = vmatpush1.msra.mxu0 %v638
        %1001 = vmatprep.subr.mxu0 %v647
        %1002 = vmatpush1.msra.mxu0 %v646
        %1003 = vmatprep.subr.mxu0 %v655
        %1004 = vmatpush1.msra.mxu0 %v654
        %1005 = vmatprep.subr.mxu0 %v663
        %1006 = vmatpush1.msra.mxu0 %v662
        %1007 = vmatprep.subr.mxu0 %v671
        %1008 = vmatpush1.msra.mxu0 %v670
        %1009 = vmatprep.subr.mxu0 %v679
        %1010 = vmatpush1.msra.mxu0 %v678
        %1011 = vmatprep.subr.mxu0 %v687
        %1012 = vmatpush1.msra.mxu0 %v686
        %1013 = vmatprep.subr.mxu0 %v695
        %1014 = vmatpush1.msra.mxu0 %v694
        %1015 = vmatprep.subr.mxu0 %v703
        %1016 = vmatpush1.msra.mxu0 %v702
        %1017 = vmatprep.subr.mxu0 %v711
        %1018 = vmatpush1.msra.mxu0 %v710
        %1019 = vmatprep.subr.mxu0 %v719
        %1020 = vmatpush1.msra.mxu0 %v718
        %1021 = vmatprep.subr.mxu0 %v727
        %1022 = vmatpush1.msra.mxu0 %v726
        %1023 = vmatprep.subr.mxu0 %v735
        %1024 = vmatpush1.msra.mxu0 %v734
        %1025 = vmatprep.subr.mxu0 %v743
        %1026 = vmatpush1.msra.mxu0 %v742
        %1027 = vmatprep.subr.mxu0 %v751
        %1028 = vmatpush1.msra.mxu0 %v750
        %1029 = vmatprep.mubr.f32.mxu0 %v495
        %1030 = vmatmul.mubr.f32.gmra.mrb[0].mxu0 %v494
        %v1031 = vpop.f32.mrb[0].mxu0
        %v1032 = vadd.f32 0.0, %v1031
        %v1033 = vpop.f32.mrb[0].mxu0
        %v1034 = vadd.f32 0.0, %v1033
        %1035 = vdwg.mxu0
        %1037 = vrot.lane.b32.xlu0 %v819, 64
        %v1038 = vpop.permute.xlu0 %1037
        %1041 = vrot.lane.b32.xlu0 %v821, 64
        %v1042 = vpop.permute.xlu0 %1041
        %1045 = vrot.lane.b32.xlu0 %v890, 64
        %v1046 = vpop.permute.xlu0 %1045
        %1049 = vrot.lane.b32.xlu0 %v892, 64
        %v1050 = vpop.permute.xlu0 %1049
        %1053 = vrot.lane.b32.xlu0 %v961, 64
        %v1054 = vpop.permute.xlu0 %1053
        %1057 = vrot.lane.b32.xlu0 %v963, 64
        %v1058 = vpop.permute.xlu0 %1057
        %1061 = vrot.lane.b32.xlu0 %v1032, 64
        %v1062 = vpop.permute.xlu0 %1061
        %1065 = vrot.lane.b32.xlu0 %v1034, 64
        %v1066 = vpop.permute.xlu0 %1065
        %v1068 = vld [vmem:[%s2] sm:$0xff]
        %v1069 = vld [vmem:[#allocation4] sm:$0xff]
        %1071 = vset.pattern.permute.xlu0 0
        %1072 = vperm.xlu0 %1071, %v1069
        %v1073 = vpop.permute.xlu0 %1072
        %1075 = vmatprep.subr.mxu0 0.0
        %1076 = vmatpush1.msra.mxu0 %v819
        %1077 = vmatprep.subr.mxu0 0.0
        %1078 = vmatpush1.msra.mxu0 %v1038
        %1079 = vmatprep.subr.mxu0 0.0
        %1080 = vmatpush1.msra.mxu0 %v821
        %1081 = vmatprep.subr.mxu0 0.0
        %1082 = vmatpush1.msra.mxu0 %v1042
        %1083 = vmatprep.subr.mxu0 0.0
        %1084 = vmatpush1.msra.mxu0 %v890
        %1085 = vmatprep.subr.mxu0 0.0
        %1086 = vmatpush1.msra.mxu0 %v1046
        %1087 = vmatprep.subr.mxu0 0.0
        %1088 = vmatpush1.msra.mxu0 %v892
        %1089 = vmatprep.subr.mxu0 0.0
        %1090 = vmatpush1.msra.mxu0 %v1050
        %1091 = vmatprep.subr.mxu0 0.0
        %1092 = vmatpush1.msra.mxu0 %v961
        %1093 = vmatprep.subr.mxu0 0.0
        %1094 = vmatpush1.msra.mxu0 %v1054
        %1095 = vmatprep.subr.mxu0 0.0
        %1096 = vmatpush1.msra.mxu0 %v963
        %1097 = vmatprep.subr.mxu0 0.0
        %1098 = vmatpush1.msra.mxu0 %v1058
        %1099 = vmatprep.subr.mxu0 0.0
        %1100 = vmatpush1.msra.mxu0 %v1032
        %1101 = vmatprep.subr.mxu0 0.0
        %1102 = vmatpush1.msra.mxu0 %v1062
        %1103 = vmatprep.subr.mxu0 0.0
        %1104 = vmatpush1.msra.mxu0 %v1034
        %1105 = vmatprep.subr.mxu0 0.0
        %1106 = vmatpush1.msra.mxu0 %v1066
        %1107 = vmatprep.subr.mxu0 0.0
        %1108 = vmatpush1.msra.mxu0 0.0
        %1109 = vmatprep.subr.mxu0 0.0
        %1110 = vmatpush1.msra.mxu0 0.0
        %1111 = vmatprep.subr.mxu0 0.0
        %1112 = vmatpush1.msra.mxu0 0.0
        %1113 = vmatprep.subr.mxu0 0.0
        %1114 = vmatpush1.msra.mxu0 0.0
        %1115 = vmatprep.subr.mxu0 0.0
        %1116 = vmatpush1.msra.mxu0 0.0
        %1117 = vmatprep.subr.mxu0 0.0
        %1118 = vmatpush1.msra.mxu0 0.0
        %1119 = vmatprep.subr.mxu0 0.0
        %1120 = vmatpush1.msra.mxu0 0.0
        %1121 = vmatprep.subr.mxu0 0.0
        %1122 = vmatpush1.msra.mxu0 0.0
        %1123 = vmatprep.subr.mxu0 0.0
        %1124 = vmatpush1.msra.mxu0 0.0
        %1125 = vmatprep.subr.mxu0 0.0
        %1126 = vmatpush1.msra.mxu0 0.0
        %1127 = vmatprep.subr.mxu0 0.0
        %1128 = vmatpush1.msra.mxu0 0.0
        %1129 = vmatprep.subr.mxu0 0.0
        %1130 = vmatpush1.msra.mxu0 0.0
        %1131 = vmatprep.subr.mxu0 0.0
        %1132 = vmatpush1.msra.mxu0 0.0
        %1133 = vmatprep.subr.mxu0 0.0
        %1134 = vmatpush1.msra.mxu0 0.0
        %1135 = vmatprep.subr.mxu0 0.0
        %1136 = vmatpush1.msra.mxu0 0.0
        %1137 = vmatprep.subr.mxu0 0.0
        %1138 = vmatpush1.msra.mxu0 0.0
        %1139 = vmatprep.mubr.f32.mxu0 0.0
        %1140 = vmatmul.mubr.f32.gmra.mrb[0].mxu0 %v1068
        %v1141 = vpop.f32.mrb[0].mxu0
        %v1142 = vadd.f32 %v1073, %v1141
        %v1143 = vpop.f32.mrb[0].mxu0
        %1144 = vdwg.mxu0
        %vm1145 = vcmp.ge.f32.partialorder %v1142, 0.0
        %v1146 = vmul.f32 %v1142, 0.1
        %v1147 = vsel %vm1145, %v1142, %v1146
        %v1148 = vld [vmem:[#allocation6] sm:$0xff]
        %v1149 = vld [vmem:[#allocation6 + $0x8] sm:$0xff]
        %v1150 = vld [vmem:[#allocation6 + $0x10] sm:$0xff]
        %v1151 = vld [vmem:[#allocation6 + $0x18] sm:$0xff]
        %v1152 = vld [vmem:[#allocation6 + $0x20] sm:$0xff]
        %v1153 = vld [vmem:[#allocation6 + $0x28] sm:$0xff]
        %v1154 = vld [vmem:[#allocation6 + $0x30] sm:$0xff]
        %v1155 = vld [vmem:[#allocation6 + $0x38] sm:$0xff]
        %v1156 = vld [vmem:[#allocation6 + $0x40] sm:$0xff]
        %v1157 = vld [vmem:[#allocation6 + $0x48] sm:$0xff]
        %v1158 = vld [vmem:[#allocation6 + $0x50] sm:$0xff]
        %v1159 = vld [vmem:[#allocation6 + $0x58] sm:$0xff]
        %v1160 = vld [vmem:[#allocation6 + $0x60] sm:$0xff]
        %v1161 = vld [vmem:[#allocation6 + $0x68] sm:$0xff]
        %v1162 = vld [vmem:[#allocation6 + $0x70] sm:$0xff]
        %v1163 = vld [vmem:[#allocation6 + $0x78] sm:$0xff]
        %vm1164 = vcmask 523264
        %v1166 = vsel %vm1164, %v1147, 0
        %1168 = vmatprep.subr.mxu0 %v1149
        %1169 = vmatpush1.msra.mxu0 %v1148
        %1170 = vmatprep.subr.mxu0 %v1151
        %1171 = vmatpush1.msra.mxu0 %v1150
        %1172 = vmatprep.subr.mxu0 %v1153
        %1173 = vmatpush1.msra.mxu0 %v1152
        %1174 = vmatprep.subr.mxu0 %v1155
        %1175 = vmatpush1.msra.mxu0 %v1154
        %1176 = vmatprep.subr.mxu0 %v1157
        %1177 = vmatpush1.msra.mxu0 %v1156
        %1178 = vmatprep.subr.mxu0 %v1159
        %1179 = vmatpush1.msra.mxu0 %v1158
        %1180 = vmatprep.subr.mxu0 %v1161
        %1181 = vmatpush1.msra.mxu0 %v1160
        %1182 = vmatprep.subr.mxu0 %v1163
        %1183 = vmatpush1.msra.mxu0 %v1162
        %1184 = vmatprep.subr.mxu0 0.0
        %1185 = vmatpush1.msra.mxu0 0.0
        %1186 = vmatprep.subr.mxu0 0.0
        %1187 = vmatpush1.msra.mxu0 0.0
        %1188 = vmatprep.subr.mxu0 0.0
        %1189 = vmatpush1.msra.mxu0 0.0
        %1190 = vmatprep.subr.mxu0 0.0
        %1191 = vmatpush1.msra.mxu0 0.0
        %1192 = vmatprep.subr.mxu0 0.0
        %1193 = vmatpush1.msra.mxu0 0.0
        %1194 = vmatprep.subr.mxu0 0.0
        %1195 = vmatpush1.msra.mxu0 0.0
        %1196 = vmatprep.subr.mxu0 0.0
        %1197 = vmatpush1.msra.mxu0 0.0
        %1198 = vmatprep.subr.mxu0 0.0
        %1199 = vmatpush1.msra.mxu0 0.0
        %1200 = vmatprep.subr.mxu0 0.0
        %1201 = vmatpush1.msra.mxu0 0.0
        %1202 = vmatprep.subr.mxu0 0.0
        %1203 = vmatpush1.msra.mxu0 0.0
        %1204 = vmatprep.subr.mxu0 0.0
        %1205 = vmatpush1.msra.mxu0 0.0
        %1206 = vmatprep.subr.mxu0 0.0
        %1207 = vmatpush1.msra.mxu0 0.0
        %1208 = vmatprep.subr.mxu0 0.0
        %1209 = vmatpush1.msra.mxu0 0.0
        %1210 = vmatprep.subr.mxu0 0.0
        %1211 = vmatpush1.msra.mxu0 0.0
        %1212 = vmatprep.subr.mxu0 0.0
        %1213 = vmatpush1.msra.mxu0 0.0
        %1214 = vmatprep.subr.mxu0 0.0
        %1215 = vmatpush1.msra.mxu0 0.0
        %1216 = vmatprep.subr.mxu0 0.0
        %1217 = vmatpush1.msra.mxu0 0.0
        %1218 = vmatprep.subr.mxu0 0.0
        %1219 = vmatpush1.msra.mxu0 0.0
        %1220 = vmatprep.subr.mxu0 0.0
        %1221 = vmatpush1.msra.mxu0 0.0
        %1222 = vmatprep.subr.mxu0 0.0
        %1223 = vmatpush1.msra.mxu0 0.0
        %1224 = vmatprep.subr.mxu0 0.0
        %1225 = vmatpush1.msra.mxu0 0.0
        %1226 = vmatprep.subr.mxu0 0.0
        %1227 = vmatpush1.msra.mxu0 0.0
        %1228 = vmatprep.subr.mxu0 0.0
        %1229 = vmatpush1.msra.mxu0 0.0
        %1230 = vmatprep.subr.mxu0 0.0
        %1231 = vmatpush1.msra.mxu0 0.0
        %1232 = vmatprep.mubr.f32.mxu0 0.0
        %1233 = vmatmul.mubr.f32.gmra.mrb[0].mxu0 %v1166
        %v1234 = vpop.f32.mrb[0].mxu0
        %v1235 = vadd.f32 0.0, %v1234
        %v1236 = vpop.f32.mrb[0].mxu0
        %v1237 = vadd.f32 0.0, %v1236
        %1238 = vdwg.mxu0
        %1240 = vrot.lane.b32.xlu0 %v1235, 112
        %v1241 = vpop.permute.xlu0 %1240
        %1243 = vrot.lane.b32.xlu0 %v1235, 96
        %v1244 = vpop.permute.xlu0 %1243
        %1246 = vrot.lane.b32.xlu0 %v1235, 80
        %v1247 = vpop.permute.xlu0 %1246
        %1249 = vrot.lane.b32.xlu0 %v1235, 64
        %v1250 = vpop.permute.xlu0 %1249
        %1252 = vrot.lane.b32.xlu0 %v1235, 48
        %v1253 = vpop.permute.xlu0 %1252
        %1255 = vrot.lane.b32.xlu0 %v1235, 32
        %v1256 = vpop.permute.xlu0 %1255
        %1258 = vrot.lane.b32.xlu0 %v1235, 16
        %v1259 = vpop.permute.xlu0 %1258
        %1262 = vrot.lane.b32.xlu0 %v1237, 112
        %v1263 = vpop.permute.xlu0 %1262
        %1265 = vrot.lane.b32.xlu0 %v1237, 96
        %v1266 = vpop.permute.xlu0 %1265
        %1268 = vrot.lane.b32.xlu0 %v1237, 80
        %v1269 = vpop.permute.xlu0 %1268
        %1271 = vrot.lane.b32.xlu0 %v1237, 64
        %v1272 = vpop.permute.xlu0 %1271
        %1274 = vrot.lane.b32.xlu0 %v1237, 48
        %v1275 = vpop.permute.xlu0 %1274
        %1277 = vrot.lane.b32.xlu0 %v1237, 32
        %v1278 = vpop.permute.xlu0 %1277
        %1280 = vrot.lane.b32.xlu0 %v1237, 16
        %v1281 = vpop.permute.xlu0 %1280
        %v1283 = vld [vmem:[%s5] sm:$0xff]
        %v1284 = vld [vmem:[%s5 + $0x8] sm:$0xff]
        %v1285 = vld [vmem:[%s6] sm:$0xff]
        %v1286 = vld [vmem:[%s6 + $0x8] sm:$0xff]
        %1288 = vset.pattern.permute.xlu0 0
        %1289 = vperm.xlu0 %1288, %v1285
        %v1290 = vpop.permute.xlu0 %1289
        %1293 = vset.pattern.permute.xlu0 0
        %1294 = vperm.xlu0 %1293, %v1286
        %v1295 = vpop.permute.xlu0 %1294
        %1297 = vmatprep.subr.mxu0 0.0
        %1298 = vmatpush1.msra.mxu0 %v1235
        %1299 = vmatprep.subr.mxu0 0.0
        %1300 = vmatpush1.msra.mxu0 %v1241
        %1301 = vmatprep.subr.mxu0 0.0
        %1302 = vmatpush1.msra.mxu0 %v1244
        %1303 = vmatprep.subr.mxu0 0.0
        %1304 = vmatpush1.msra.mxu0 %v1247
        %1305 = vmatprep.subr.mxu0 0.0
        %1306 = vmatpush1.msra.mxu0 %v1250
        %1307 = vmatprep.subr.mxu0 0.0
        %1308 = vmatpush1.msra.mxu0 %v1253
        %1309 = vmatprep.subr.mxu0 0.0
        %1310 = vmatpush1.msra.mxu0 %v1256
        %1311 = vmatprep.subr.mxu0 0.0
        %1312 = vmatpush1.msra.mxu0 %v1259
        %1313 = vmatprep.subr.mxu0 0.0
        %1314 = vmatpush1.msra.mxu0 %v1237
        %1315 = vmatprep.subr.mxu0 0.0
        %1316 = vmatpush1.msra.mxu0 %v1263
        %1317 = vmatprep.subr.mxu0 0.0
        %1318 = vmatpush1.msra.mxu0 %v1266
        %1319 = vmatprep.subr.mxu0 0.0
        %1320 = vmatpush1.msra.mxu0 %v1269
        %1321 = vmatprep.subr.mxu0 0.0
        %1322 = vmatpush1.msra.mxu0 %v1272
        %1323 = vmatprep.subr.mxu0 0.0
        %1324 = vmatpush1.msra.mxu0 %v1275
        %1325 = vmatprep.subr.mxu0 0.0
        %1326 = vmatpush1.msra.mxu0 %v1278
        %1327 = vmatprep.subr.mxu0 0.0
        %1328 = vmatpush1.msra.mxu0 %v1281
        %1329 = vmatprep.subr.mxu0 0.0
        %1330 = vmatpush1.msra.mxu0 0.0
        %1331 = vmatprep.subr.mxu0 0.0
        %1332 = vmatpush1.msra.mxu0 0.0
        %1333 = vmatprep.subr.mxu0 0.0
        %1334 = vmatpush1.msra.mxu0 0.0
        %1335 = vmatprep.subr.mxu0 0.0
        %1336 = vmatpush1.msra.mxu0 0.0
        %1337 = vmatprep.subr.mxu0 0.0
        %1338 = vmatpush1.msra.mxu0 0.0
        %1339 = vmatprep.subr.mxu0 0.0
        %1340 = vmatpush1.msra.mxu0 0.0
        %1341 = vmatprep.subr.mxu0 0.0
        %1342 = vmatpush1.msra.mxu0 0.0
        %1343 = vmatprep.subr.mxu0 0.0
        %1344 = vmatpush1.msra.mxu0 0.0
        %1345 = vmatprep.subr.mxu0 0.0
        %1346 = vmatpush1.msra.mxu0 0.0
        %1347 = vmatprep.subr.mxu0 0.0
        %1348 = vmatpush1.msra.mxu0 0.0
        %1349 = vmatprep.subr.mxu0 0.0
        %1350 = vmatpush1.msra.mxu0 0.0
        %1351 = vmatprep.subr.mxu0 0.0
        %1352 = vmatpush1.msra.mxu0 0.0
        %1353 = vmatprep.subr.mxu0 0.0
        %1354 = vmatpush1.msra.mxu0 0.0
        %1355 = vmatprep.subr.mxu0 0.0
        %1356 = vmatpush1.msra.mxu0 0.0
        %1357 = vmatprep.subr.mxu0 0.0
        %1358 = vmatpush1.msra.mxu0 0.0
        %1359 = vmatprep.subr.mxu0 0.0
        %1360 = vmatpush1.msra.mxu0 0.0
        %1361 = vmatprep.mubr.f32.mxu0 0.0
        %1362 = vmatmul.mubr.f32.gmra.mrb[0].mxu0 %v1283
        %v1363 = vpop.f32.mrb[0].mxu0
        %v1364 = vadd.f32 %v1290, %v1363
        %v1365 = vpop.f32.mrb[0].mxu0
        %1366 = vmatprep.mubr.f32.mxu0 0.0
        %1367 = vmatmul.mubr.f32.gmra.mrb[0].mxu0 %v1284
        %v1368 = vpop.f32.mrb[0].mxu0
        %v1369 = vadd.f32 %v1295, %v1368
        %v1370 = vpop.f32.mrb[0].mxu0
        %1371 = vdwg.mxu0
        %vm1372 = vcmp.ge.f32.partialorder %v1364, 0.0
        %vm1373 = vcmp.ge.f32.partialorder %v1369, 0.0
        %v1374 = vmul.f32 %v1364, 0.1
        %v1375 = vmul.f32 %v1369, 0.1
        %v1376 = vsel %vm1372, %v1364, %v1374
        %v1377 = vsel %vm1373, %v1369, %v1375
        %v1378 = vld [vmem:[#allocation7] sm:$0xff]
        %v1379 = vld [vmem:[#allocation7 + $0x8] sm:$0xff]
        %vm1380 = vcmask 130048
        %v1382 = vsel %vm1380, %v1376, 0
        %v1385 = vsel %vm1380, %v1377, 0
        %1387 = vmatprep.subr.mxu0 0.0
        %1388 = vmatpush1.msra.mxu0 %v1378
        %1389 = vmatprep.subr.mxu0 0.0
        %1390 = vmatpush1.msra.mxu0 %v1379
        %1391 = vmatprep.subr.mxu0 0.0
        %1392 = vmatpush1.msra.mxu0 0.0
        %1393 = vmatprep.subr.mxu0 0.0
        %1394 = vmatpush1.msra.mxu0 0.0
        %1395 = vmatprep.subr.mxu0 0.0
        %1396 = vmatpush1.msra.mxu0 0.0
        %1397 = vmatprep.subr.mxu0 0.0
        %1398 = vmatpush1.msra.mxu0 0.0
        %1399 = vmatprep.subr.mxu0 0.0
        %1400 = vmatpush1.msra.mxu0 0.0
        %1401 = vmatprep.subr.mxu0 0.0
        %1402 = vmatpush1.msra.mxu0 0.0
        %1403 = vmatprep.subr.mxu0 0.0
        %1404 = vmatpush1.msra.mxu0 0.0
        %1405 = vmatprep.subr.mxu0 0.0
        %1406 = vmatpush1.msra.mxu0 0.0
        %1407 = vmatprep.subr.mxu0 0.0
        %1408 = vmatpush1.msra.mxu0 0.0
        %1409 = vmatprep.subr.mxu0 0.0
        %1410 = vmatpush1.msra.mxu0 0.0
        %1411 = vmatprep.subr.mxu0 0.0
        %1412 = vmatpush1.msra.mxu0 0.0
        %1413 = vmatprep.subr.mxu0 0.0
        %1414 = vmatpush1.msra.mxu0 0.0
        %1415 = vmatprep.subr.mxu0 0.0
        %1416 = vmatpush1.msra.mxu0 0.0
        %1417 = vmatprep.subr.mxu0 0.0
        %1418 = vmatpush1.msra.mxu0 0.0
        %1419 = vmatprep.subr.mxu0 0.0
        %1420 = vmatpush1.msra.mxu0 0.0
        %1421 = vmatprep.subr.mxu0 0.0
        %1422 = vmatpush1.msra.mxu0 0.0
        %1423 = vmatprep.subr.mxu0 0.0
        %1424 = vmatpush1.msra.mxu0 0.0
        %1425 = vmatprep.subr.mxu0 0.0
        %1426 = vmatpush1.msra.mxu0 0.0
        %1427 = vmatprep.subr.mxu0 0.0
        %1428 = vmatpush1.msra.mxu0 0.0
        %1429 = vmatprep.subr.mxu0 0.0
        %1430 = vmatpush1.msra.mxu0 0.0
        %1431 = vmatprep.subr.mxu0 0.0
        %1432 = vmatpush1.msra.mxu0 0.0
        %1433 = vmatprep.subr.mxu0 0.0
        %1434 = vmatpush1.msra.mxu0 0.0
        %1435 = vmatprep.subr.mxu0 0.0
        %1436 = vmatpush1.msra.mxu0 0.0
        %1437 = vmatprep.subr.mxu0 0.0
        %1438 = vmatpush1.msra.mxu0 0.0
        %1439 = vmatprep.subr.mxu0 0.0
        %1440 = vmatpush1.msra.mxu0 0.0
        %1441 = vmatprep.subr.mxu0 0.0
        %1442 = vmatpush1.msra.mxu0 0.0
        %1443 = vmatprep.subr.mxu0 0.0
        %1444 = vmatpush1.msra.mxu0 0.0
        %1445 = vmatprep.subr.mxu0 0.0
        %1446 = vmatpush1.msra.mxu0 0.0
        %1447 = vmatprep.subr.mxu0 0.0
        %1448 = vmatpush1.msra.mxu0 0.0
        %1449 = vmatprep.subr.mxu0 0.0
        %1450 = vmatpush1.msra.mxu0 0.0
        %1451 = vmatprep.mubr.f32.mxu0 0.0
        %1452 = vmatmul.mubr.f32.gmra.mrb[0].mxu0 %v1382
        %v1453 = vpop.f32.mrb[0].mxu0
        %v1454 = vadd.f32 0.0, %v1453
        %v1455 = vpop.f32.mrb[0].mxu0
        %1456 = vmatprep.mubr.f32.mxu0 0.0
        %1457 = vmatmul.mubr.f32.gmra.mrb[0].mxu0 %v1385
        %v1458 = vpop.f32.mrb[0].mxu0
        %v1459 = vadd.f32 0.0, %v1458
        %v1460 = vpop.f32.mrb[0].mxu0
        %1461 = vdwg.mxu0
        %1464 = vrot.lane.b32.xlu0 %v1454, 124
        %v1465 = vpop.permute.xlu0 %1464
        %1466 = vrot.lane.b32.xlu0 %v1459, 124
        %v1467 = vpop.permute.xlu0 %1466
        %1470 = vrot.lane.b32.xlu0 %v1454, 120
        %v1471 = vpop.permute.xlu0 %1470
        %1472 = vrot.lane.b32.xlu0 %v1459, 120
        %v1473 = vpop.permute.xlu0 %1472
        %1476 = vrot.lane.b32.xlu0 %v1454, 116
        %v1477 = vpop.permute.xlu0 %1476
        %1478 = vrot.lane.b32.xlu0 %v1459, 116
        %v1479 = vpop.permute.xlu0 %1478
        %1482 = vrot.lane.b32.xlu0 %v1454, 112
        %v1483 = vpop.permute.xlu0 %1482
        %1484 = vrot.lane.b32.xlu0 %v1459, 112
        %v1485 = vpop.permute.xlu0 %1484
        %1488 = vrot.lane.b32.xlu0 %v1454, 108
        %v1489 = vpop.permute.xlu0 %1488
        %1490 = vrot.lane.b32.xlu0 %v1459, 108
        %v1491 = vpop.permute.xlu0 %1490
        %1494 = vrot.lane.b32.xlu0 %v1454, 104
        %v1495 = vpop.permute.xlu0 %1494
        %1496 = vrot.lane.b32.xlu0 %v1459, 104
        %v1497 = vpop.permute.xlu0 %1496
        %1500 = vrot.lane.b32.xlu0 %v1454, 100
        %v1501 = vpop.permute.xlu0 %1500
        %1502 = vrot.lane.b32.xlu0 %v1459, 100
        %v1503 = vpop.permute.xlu0 %1502
        %1506 = vrot.lane.b32.xlu0 %v1454, 96
        %v1507 = vpop.permute.xlu0 %1506
        %1508 = vrot.lane.b32.xlu0 %v1459, 96
        %v1509 = vpop.permute.xlu0 %1508
        %1512 = vrot.lane.b32.xlu0 %v1454, 92
        %v1513 = vpop.permute.xlu0 %1512
        %1514 = vrot.lane.b32.xlu0 %v1459, 92
        %v1515 = vpop.permute.xlu0 %1514
        %1518 = vrot.lane.b32.xlu0 %v1454, 88
        %v1519 = vpop.permute.xlu0 %1518
        %1520 = vrot.lane.b32.xlu0 %v1459, 88
        %v1521 = vpop.permute.xlu0 %1520
        %1524 = vrot.lane.b32.xlu0 %v1454, 84
        %v1525 = vpop.permute.xlu0 %1524
        %1526 = vrot.lane.b32.xlu0 %v1459, 84
        %v1527 = vpop.permute.xlu0 %1526
        %1530 = vrot.lane.b32.xlu0 %v1454, 80
        %v1531 = vpop.permute.xlu0 %1530
        %1532 = vrot.lane.b32.xlu0 %v1459, 80
        %v1533 = vpop.permute.xlu0 %1532
        %1536 = vrot.lane.b32.xlu0 %v1454, 76
        %v1537 = vpop.permute.xlu0 %1536
        %1538 = vrot.lane.b32.xlu0 %v1459, 76
        %v1539 = vpop.permute.xlu0 %1538
        %1542 = vrot.lane.b32.xlu0 %v1454, 72
        %v1543 = vpop.permute.xlu0 %1542
        %1544 = vrot.lane.b32.xlu0 %v1459, 72
        %v1545 = vpop.permute.xlu0 %1544
        %1548 = vrot.lane.b32.xlu0 %v1454, 68
        %v1549 = vpop.permute.xlu0 %1548
        %1550 = vrot.lane.b32.xlu0 %v1459, 68
        %v1551 = vpop.permute.xlu0 %1550
        %v1554 = vld [vmem:[%s8] sm:$0xff]
        %v1555 = vld [vmem:[%s8 + $0x8] sm:$0xff]
        %v1556 = vld [vmem:[%s8 + $0x10] sm:$0xff]
        %v1557 = vld [vmem:[%s8 + $0x18] sm:$0xff]
        %v1558 = vld [vmem:[%s8 + $0x20] sm:$0xff]
        %v1559 = vld [vmem:[%s8 + $0x28] sm:$0xff]
        %v1560 = vld [vmem:[%s8 + $0x30] sm:$0xff]
        %v1561 = vld [vmem:[%s8 + $0x38] sm:$0xff]
        %v1562 = vld [vmem:[#allocation9] sm:$0xff]
        %v1563 = vld [vmem:[#allocation9 + $0x8] sm:$0xff]
        %v1564 = vld [vmem:[#allocation9 + $0x10] sm:$0xff]
        %v1565 = vld [vmem:[#allocation9 + $0x18] sm:$0xff]
        %1567 = vset.pattern.permute.xlu0 0
        %1568 = vperm.xlu0 %1567, %v1562
        %v1569 = vpop.permute.xlu0 %1568
        %1572 = vset.pattern.permute.xlu0 0
        %1573 = vperm.xlu0 %1572, %v1563
        %v1574 = vpop.permute.xlu0 %1573
        %1577 = vset.pattern.permute.xlu0 0
        %1578 = vperm.xlu0 %1577, %v1564
        %v1579 = vpop.permute.xlu0 %1578
        %1582 = vset.pattern.permute.xlu0 0
        %1583 = vperm.xlu0 %1582, %v1565
        %v1584 = vpop.permute.xlu0 %1583
        %1586 = vmatprep.subr.mxu0 0.0
        %1587 = vmatpush1.msra.mxu0 %v1454
        %1588 = vmatprep.subr.mxu0 0.0
        %1589 = vmatpush1.msra.mxu0 %v1459
        %1590 = vmatprep.subr.mxu0 0.0
        %1591 = vmatpush1.msra.mxu0 %v1465
        %1592 = vmatprep.subr.mxu0 0.0
        %1593 = vmatpush1.msra.mxu0 %v1467
        %1594 = vmatprep.subr.mxu0 0.0
        %1595 = vmatpush1.msra.mxu0 %v1471
        %1596 = vmatprep.subr.mxu0 0.0
        %1597 = vmatpush1.msra.mxu0 %v1473
        %1598 = vmatprep.subr.mxu0 0.0
        %1599 = vmatpush1.msra.mxu0 %v1477
        %1600 = vmatprep.subr.mxu0 0.0
        %1601 = vmatpush1.msra.mxu0 %v1479
        %1602 = vmatprep.subr.mxu0 0.0
        %1603 = vmatpush1.msra.mxu0 %v1483
        %1604 = vmatprep.subr.mxu0 0.0
        %1605 = vmatpush1.msra.mxu0 %v1485
        %1606 = vmatprep.subr.mxu0 0.0
        %1607 = vmatpush1.msra.mxu0 %v1489
        %1608 = vmatprep.subr.mxu0 0.0
        %1609 = vmatpush1.msra.mxu0 %v1491
        %1610 = vmatprep.subr.mxu0 0.0
        %1611 = vmatpush1.msra.mxu0 %v1495
        %1612 = vmatprep.subr.mxu0 0.0
        %1613 = vmatpush1.msra.mxu0 %v1497
        %1614 = vmatprep.subr.mxu0 0.0
        %1615 = vmatpush1.msra.mxu0 %v1501
        %1616 = vmatprep.subr.mxu0 0.0
        %1617 = vmatpush1.msra.mxu0 %v1503
        %1618 = vmatprep.subr.mxu0 0.0
        %1619 = vmatpush1.msra.mxu0 %v1507
        %1620 = vmatprep.subr.mxu0 0.0
        %1621 = vmatpush1.msra.mxu0 %v1509
        %1622 = vmatprep.subr.mxu0 0.0
        %1623 = vmatpush1.msra.mxu0 %v1513
        %1624 = vmatprep.subr.mxu0 0.0
        %1625 = vmatpush1.msra.mxu0 %v1515
        %1626 = vmatprep.subr.mxu0 0.0
        %1627 = vmatpush1.msra.mxu0 %v1519
        %1628 = vmatprep.subr.mxu0 0.0
        %1629 = vmatpush1.msra.mxu0 %v1521
        %1630 = vmatprep.subr.mxu0 0.0
        %1631 = vmatpush1.msra.mxu0 %v1525
        %1632 = vmatprep.subr.mxu0 0.0
        %1633 = vmatpush1.msra.mxu0 %v1527
        %1634 = vmatprep.subr.mxu0 0.0
        %1635 = vmatpush1.msra.mxu0 %v1531
        %1636 = vmatprep.subr.mxu0 0.0
        %1637 = vmatpush1.msra.mxu0 %v1533
        %1638 = vmatprep.subr.mxu0 0.0
        %1639 = vmatpush1.msra.mxu0 %v1537
        %1640 = vmatprep.subr.mxu0 0.0
        %1641 = vmatpush1.msra.mxu0 %v1539
        %1642 = vmatprep.subr.mxu0 0.0
        %1643 = vmatpush1.msra.mxu0 %v1543
        %1644 = vmatprep.subr.mxu0 0.0
        %1645 = vmatpush1.msra.mxu0 %v1545
        %1646 = vmatprep.subr.mxu0 0.0
        %1647 = vmatpush1.msra.mxu0 %v1549
        %1648 = vmatprep.subr.mxu0 0.0
        %1649 = vmatpush1.msra.mxu0 %v1551
        %1650 = vmatprep.mubr.f32.mxu0 %v1555
        %1651 = vmatmul.mubr.f32.gmra.mrb[0].mxu0 %v1554
        %v1652 = vpop.f32.mrb[0].mxu0
        %v1653 = vadd.f32 %v1569, %v1652
        %v1654 = vpop.f32.mrb[0].mxu0
        %1655 = vmatprep.mubr.f32.mxu0 %v1557
        %1656 = vmatmul.mubr.f32.gmra.mrb[0].mxu0 %v1556
        %v1657 = vpop.f32.mrb[0].mxu0
        %v1658 = vadd.f32 %v1574, %v1657
        %v1659 = vpop.f32.mrb[0].mxu0
        %1660 = vmatprep.mubr.f32.mxu0 %v1559
        %1661 = vmatmul.mubr.f32.gmra.mrb[0].mxu0 %v1558
        %v1662 = vpop.f32.mrb[0].mxu0
        %v1663 = vadd.f32 %v1579, %v1662
        %v1664 = vpop.f32.mrb[0].mxu0
        %1665 = vmatprep.mubr.f32.mxu0 %v1561
        %1666 = vmatmul.mubr.f32.gmra.mrb[0].mxu0 %v1560
        %v1667 = vpop.f32.mrb[0].mxu0
        %v1668 = vadd.f32 %v1584, %v1667
        %v1669 = vpop.f32.mrb[0].mxu0
        %1670 = vdwg.mxu0
        %vm1671 = vcmp.ge.f32.partialorder %v1653, 0.0
        %vm1672 = vcmp.ge.f32.partialorder %v1658, 0.0
        %vm1673 = vcmp.ge.f32.partialorder %v1663, 0.0
        %vm1674 = vcmp.ge.f32.partialorder %v1668, 0.0
        %v1675 = vmul.f32 %v1653, 0.1
        %v1676 = vmul.f32 %v1658, 0.1
        %v1677 = vmul.f32 %v1663, 0.1
        %v1678 = vmul.f32 %v1668, 0.1
        %v1679 = vsel %vm1671, %v1653, %v1675
        %v1680 = vsel %vm1672, %v1658, %v1676
        %v1681 = vsel %vm1673, %v1663, %v1677
        %v1682 = vsel %vm1674, %v1668, %v1678
        %v1683 = vld [vmem:[#allocation10] sm:$0xf]
        %vm1684 = vcmask 31744
        %v1686 = vsel %vm1684, %v1679, 0
        %v1689 = vsel %vm1684, %v1680, 0
        %v1692 = vsel %vm1684, %v1681, 0
        %v1695 = vsel %vm1684, %v1682, 0
        %vm1697 = vcmask 1043456
        %v1699 = vsel %vm1697, %v1683, 0
        %1701 = vmatprep.subr.mxu0 0.0
        %1702 = vmatpush1.msra.mxu0 %v1699
        %1703 = vmatprep.subr.mxu0 0.0
        %1704 = vmatpush1.msra.mxu0 0.0
        %1705 = vmatprep.subr.mxu0 0.0
        %1706 = vmatpush1.msra.mxu0 0.0
        %1707 = vmatprep.subr.mxu0 0.0
        %1708 = vmatpush1.msra.mxu0 0.0
        %1709 = vmatprep.subr.mxu0 0.0
        %1710 = vmatpush1.msra.mxu0 0.0
        %1711 = vmatprep.subr.mxu0 0.0
        %1712 = vmatpush1.msra.mxu0 0.0
        %1713 = vmatprep.subr.mxu0 0.0
        %1714 = vmatpush1.msra.mxu0 0.0
        %1715 = vmatprep.subr.mxu0 0.0
        %1716 = vmatpush1.msra.mxu0 0.0
        %1717 = vmatprep.subr.mxu0 0.0
        %1718 = vmatpush1.msra.mxu0 0.0
        %1719 = vmatprep.subr.mxu0 0.0
        %1720 = vmatpush1.msra.mxu0 0.0
        %1721 = vmatprep.subr.mxu0 0.0
        %1722 = vmatpush1.msra.mxu0 0.0
        %1723 = vmatprep.subr.mxu0 0.0
        %1724 = vmatpush1.msra.mxu0 0.0
        %1725 = vmatprep.subr.mxu0 0.0
        %1726 = vmatpush1.msra.mxu0 0.0
        %1727 = vmatprep.subr.mxu0 0.0
        %1728 = vmatpush1.msra.mxu0 0.0
        %1729 = vmatprep.subr.mxu0 0.0
        %1730 = vmatpush1.msra.mxu0 0.0
        %1731 = vmatprep.subr.mxu0 0.0
        %1732 = vmatpush1.msra.mxu0 0.0
        %1733 = vmatprep.subr.mxu0 0.0
        %1734 = vmatpush1.msra.mxu0 0.0
        %1735 = vmatprep.subr.mxu0 0.0
        %1736 = vmatpush1.msra.mxu0 0.0
        %1737 = vmatprep.subr.mxu0 0.0
        %1738 = vmatpush1.msra.mxu0 0.0
        %1739 = vmatprep.subr.mxu0 0.0
        %1740 = vmatpush1.msra.mxu0 0.0
        %1741 = vmatprep.subr.mxu0 0.0
        %1742 = vmatpush1.msra.mxu0 0.0
        %1743 = vmatprep.subr.mxu0 0.0
        %1744 = vmatpush1.msra.mxu0 0.0
        %1745 = vmatprep.subr.mxu0 0.0
        %1746 = vmatpush1.msra.mxu0 0.0
        %1747 = vmatprep.subr.mxu0 0.0
        %1748 = vmatpush1.msra.mxu0 0.0
        %1749 = vmatprep.subr.mxu0 0.0
        %1750 = vmatpush1.msra.mxu0 0.0
        %1751 = vmatprep.subr.mxu0 0.0
        %1752 = vmatpush1.msra.mxu0 0.0
        %1753 = vmatprep.subr.mxu0 0.0
        %1754 = vmatpush1.msra.mxu0 0.0
        %1755 = vmatprep.subr.mxu0 0.0
        %1756 = vmatpush1.msra.mxu0 0.0
        %1757 = vmatprep.subr.mxu0 0.0
        %1758 = vmatpush1.msra.mxu0 0.0
        %1759 = vmatprep.subr.mxu0 0.0
        %1760 = vmatpush1.msra.mxu0 0.0
        %1761 = vmatprep.subr.mxu0 0.0
        %1762 = vmatpush1.msra.mxu0 0.0
        %1763 = vmatprep.subr.mxu0 0.0
        %1764 = vmatpush1.msra.mxu0 0.0
        %1765 = vmatprep.mubr.f32.mxu0 0.0
        %1766 = vmatmul.mubr.f32.gmra.mrb[0].mxu0 %v1686
        %v1767 = vpop.f32.mrb[0].mxu0
        %v1768 = vadd.f32 0.0, %v1767
        %v1769 = vpop.f32.mrb[0].mxu0
        %1770 = vmatprep.mubr.f32.mxu0 0.0
        %1771 = vmatmul.mubr.f32.gmra.mrb[0].mxu0 %v1689
        %v1772 = vpop.f32.mrb[0].mxu0
        %v1773 = vadd.f32 0.0, %v1772
        %v1774 = vpop.f32.mrb[0].mxu0
        %1775 = vmatprep.mubr.f32.mxu0 0.0
        %1776 = vmatmul.mubr.f32.gmra.mrb[0].mxu0 %v1692
        %v1777 = vpop.f32.mrb[0].mxu0
        %v1778 = vadd.f32 0.0, %v1777
        %v1779 = vpop.f32.mrb[0].mxu0
        %1780 = vmatprep.mubr.f32.mxu0 0.0
        %1781 = vmatmul.mubr.f32.gmra.mrb[0].mxu0 %v1695
        %v1782 = vpop.f32.mrb[0].mxu0
        %v1783 = vadd.f32 0.0, %v1782
        %v1784 = vpop.f32.mrb[0].mxu0
        %1785 = vdwg.mxu0
        %1790 = vrot.lane.b32.xlu0 %v1768, 124
        %v1791 = vpop.permute.xlu0 %1790
        %1792 = vrot.lane.b32.xlu0 %v1773, 124
        %v1793 = vpop.permute.xlu0 %1792
        %1794 = vrot.lane.b32.xlu0 %v1778, 124
        %v1795 = vpop.permute.xlu0 %1794
        %1796 = vrot.lane.b32.xlu0 %v1783, 124
        %v1797 = vpop.permute.xlu0 %1796
        %1802 = vrot.lane.b32.xlu0 %v1768, 120
        %v1803 = vpop.permute.xlu0 %1802
        %1804 = vrot.lane.b32.xlu0 %v1773, 120
        %v1805 = vpop.permute.xlu0 %1804
        %1806 = vrot.lane.b32.xlu0 %v1778, 120
        %v1807 = vpop.permute.xlu0 %1806
        %1808 = vrot.lane.b32.xlu0 %v1783, 120
        %v1809 = vpop.permute.xlu0 %1808
        %1814 = vrot.lane.b32.xlu0 %v1768, 116
        %v1815 = vpop.permute.xlu0 %1814
        %1816 = vrot.lane.b32.xlu0 %v1773, 116
        %v1817 = vpop.permute.xlu0 %1816
        %1818 = vrot.lane.b32.xlu0 %v1778, 116
        %v1819 = vpop.permute.xlu0 %1818
        %1820 = vrot.lane.b32.xlu0 %v1783, 116
        %v1821 = vpop.permute.xlu0 %1820
        %1826 = vrot.lane.b32.xlu0 %v1768, 112
        %v1827 = vpop.permute.xlu0 %1826
        %1828 = vrot.lane.b32.xlu0 %v1773, 112
        %v1829 = vpop.permute.xlu0 %1828
        %1830 = vrot.lane.b32.xlu0 %v1778, 112
        %v1831 = vpop.permute.xlu0 %1830
        %1832 = vrot.lane.b32.xlu0 %v1783, 112
        %v1833 = vpop.permute.xlu0 %1832
        %1838 = vrot.lane.b32.xlu0 %v1768, 108
        %v1839 = vpop.permute.xlu0 %1838
        %1840 = vrot.lane.b32.xlu0 %v1773, 108
        %v1841 = vpop.permute.xlu0 %1840
        %1842 = vrot.lane.b32.xlu0 %v1778, 108
        %v1843 = vpop.permute.xlu0 %1842
        %1844 = vrot.lane.b32.xlu0 %v1783, 108
        %v1845 = vpop.permute.xlu0 %1844
        %1850 = vrot.lane.b32.xlu0 %v1768, 104
        %v1851 = vpop.permute.xlu0 %1850
        %1852 = vrot.lane.b32.xlu0 %v1773, 104
        %v1853 = vpop.permute.xlu0 %1852
        %1854 = vrot.lane.b32.xlu0 %v1778, 104
        %v1855 = vpop.permute.xlu0 %1854
        %1856 = vrot.lane.b32.xlu0 %v1783, 104
        %v1857 = vpop.permute.xlu0 %1856
        %1862 = vrot.lane.b32.xlu0 %v1768, 100
        %v1863 = vpop.permute.xlu0 %1862
        %1864 = vrot.lane.b32.xlu0 %v1773, 100
        %v1865 = vpop.permute.xlu0 %1864
        %1866 = vrot.lane.b32.xlu0 %v1778, 100
        %v1867 = vpop.permute.xlu0 %1866
        %1868 = vrot.lane.b32.xlu0 %v1783, 100
        %v1869 = vpop.permute.xlu0 %1868
        %1874 = vrot.lane.b32.xlu0 %v1768, 96
        %v1875 = vpop.permute.xlu0 %1874
        %1876 = vrot.lane.b32.xlu0 %v1773, 96
        %v1877 = vpop.permute.xlu0 %1876
        %1878 = vrot.lane.b32.xlu0 %v1778, 96
        %v1879 = vpop.permute.xlu0 %1878
        %1880 = vrot.lane.b32.xlu0 %v1783, 96
        %v1881 = vpop.permute.xlu0 %1880
        %v1886 = vld [vmem:[%s11] sm:$0x7]
        %v1888 = vlaneseq
        %v1889 = vshrl.u32 %v1888, 7
        %v1890 = vsub.s32 0, %v1889
        %v1891 = vrot.slane %v1886, %v1890
        %v1892 = vlaneseq
        %v1893 = vshrl.u32 %v1892, 7
        %v1894 = vsub.s32 1, %v1893
        %v1895 = vrot.slane %v1886, %v1894
        %v1896 = vlaneseq
        %v1897 = vshrl.u32 %v1896, 7
        %v1898 = vsub.s32 2, %v1897
        %v1899 = vrot.slane %v1886, %v1898
        %vm1902 = vcmask 261120
        %v1903 = vsel %vm1902, %v1899, 0
        %1905 = vmatprep.subr.mxu0 0.0
        %1906 = vmatpush1.msra.mxu0 %v1768
        %1907 = vmatprep.subr.mxu0 0.0
        %1908 = vmatpush1.msra.mxu0 %v1773
        %1909 = vmatprep.subr.mxu0 0.0
        %1910 = vmatpush1.msra.mxu0 %v1778
        %1911 = vmatprep.subr.mxu0 0.0
        %1912 = vmatpush1.msra.mxu0 %v1783
        %1913 = vmatprep.subr.mxu0 0.0
        %1914 = vmatpush1.msra.mxu0 %v1791
        %1915 = vmatprep.subr.mxu0 0.0
        %1916 = vmatpush1.msra.mxu0 %v1793
        %1917 = vmatprep.subr.mxu0 0.0
        %1918 = vmatpush1.msra.mxu0 %v1795
        %1919 = vmatprep.subr.mxu0 0.0
        %1920 = vmatpush1.msra.mxu0 %v1797
        %1921 = vmatprep.subr.mxu0 0.0
        %1922 = vmatpush1.msra.mxu0 %v1803
        %1923 = vmatprep.subr.mxu0 0.0
        %1924 = vmatpush1.msra.mxu0 %v1805
        %1925 = vmatprep.subr.mxu0 0.0
        %1926 = vmatpush1.msra.mxu0 %v1807
        %1927 = vmatprep.subr.mxu0 0.0
        %1928 = vmatpush1.msra.mxu0 %v1809
        %1929 = vmatprep.subr.mxu0 0.0
        %1930 = vmatpush1.msra.mxu0 %v1815
        %1931 = vmatprep.subr.mxu0 0.0
        %1932 = vmatpush1.msra.mxu0 %v1817
        %1933 = vmatprep.subr.mxu0 0.0
        %1934 = vmatpush1.msra.mxu0 %v1819
        %1935 = vmatprep.subr.mxu0 0.0
        %1936 = vmatpush1.msra.mxu0 %v1821
        %1937 = vmatprep.subr.mxu0 0.0
        %1938 = vmatpush1.msra.mxu0 %v1827
        %1939 = vmatprep.subr.mxu0 0.0
        %1940 = vmatpush1.msra.mxu0 %v1829
        %1941 = vmatprep.subr.mxu0 0.0
        %1942 = vmatpush1.msra.mxu0 %v1831
        %1943 = vmatprep.subr.mxu0 0.0
        %1944 = vmatpush1.msra.mxu0 %v1833
        %1945 = vmatprep.subr.mxu0 0.0
        %1946 = vmatpush1.msra.mxu0 %v1839
        %1947 = vmatprep.subr.mxu0 0.0
        %1948 = vmatpush1.msra.mxu0 %v1841
        %1949 = vmatprep.subr.mxu0 0.0
        %1950 = vmatpush1.msra.mxu0 %v1843
        %1951 = vmatprep.subr.mxu0 0.0
        %1952 = vmatpush1.msra.mxu0 %v1845
        %1953 = vmatprep.subr.mxu0 0.0
        %1954 = vmatpush1.msra.mxu0 %v1851
        %1955 = vmatprep.subr.mxu0 0.0
        %1956 = vmatpush1.msra.mxu0 %v1853
        %1957 = vmatprep.subr.mxu0 0.0
        %1958 = vmatpush1.msra.mxu0 %v1855
        %1959 = vmatprep.subr.mxu0 0.0
        %1960 = vmatpush1.msra.mxu0 %v1857
        %1961 = vmatprep.subr.mxu0 0.0
        %1962 = vmatpush1.msra.mxu0 %v1863
        %1963 = vmatprep.subr.mxu0 0.0
        %1964 = vmatpush1.msra.mxu0 %v1865
        %1965 = vmatprep.subr.mxu0 0.0
        %1966 = vmatpush1.msra.mxu0 %v1867
        %1967 = vmatprep.subr.mxu0 0.0
        %1968 = vmatpush1.msra.mxu0 %v1869
        %1969 = vmatprep.mubr.f32.mxu0 %v1895
        %1970 = vmatmul.mubr.f32.gmra.mrb[0].mxu0 %v1891
        %v1971 = vpop.f32.mrb[0].mxu0
        %v1972 = vadd.f32 0.0, %v1971
        %v1973 = vpop.f32.mrb[0].mxu0
        %1974 = vdwg.mxu0
        %1975 = vmatprep.subr.mxu0 0.0
        %1976 = vmatpush1.msra.mxu0 %v1875
        %1977 = vmatprep.subr.mxu0 0.0
        %1978 = vmatpush1.msra.mxu0 %v1877
        %1979 = vmatprep.subr.mxu0 0.0
        %1980 = vmatpush1.msra.mxu0 %v1879
        %1981 = vmatprep.subr.mxu0 0.0
        %1982 = vmatpush1.msra.mxu0 %v1881
        %1983 = vmatprep.subr.mxu0 0.0
        %1984 = vmatpush1.msra.mxu0 0.0
        %1985 = vmatprep.subr.mxu0 0.0
        %1986 = vmatpush1.msra.mxu0 0.0
        %1987 = vmatprep.subr.mxu0 0.0
        %1988 = vmatpush1.msra.mxu0 0.0
        %1989 = vmatprep.subr.mxu0 0.0
        %1990 = vmatpush1.msra.mxu0 0.0
        %1991 = vmatprep.subr.mxu0 0.0
        %1992 = vmatpush1.msra.mxu0 0.0
        %1993 = vmatprep.subr.mxu0 0.0
        %1994 = vmatpush1.msra.mxu0 0.0
        %1995 = vmatprep.subr.mxu0 0.0
        %1996 = vmatpush1.msra.mxu0 0.0
        %1997 = vmatprep.subr.mxu0 0.0
        %1998 = vmatpush1.msra.mxu0 0.0
        %1999 = vmatprep.subr.mxu0 0.0
        %2000 = vmatpush1.msra.mxu0 0.0
        %2001 = vmatprep.subr.mxu0 0.0
        %2002 = vmatpush1.msra.mxu0 0.0
        %2003 = vmatprep.subr.mxu0 0.0
        %2004 = vmatpush1.msra.mxu0 0.0
        %2005 = vmatprep.subr.mxu0 0.0
        %2006 = vmatpush1.msra.mxu0 0.0
        %2007 = vmatprep.subr.mxu0 0.0
        %2008 = vmatpush1.msra.mxu0 0.0
        %2009 = vmatprep.subr.mxu0 0.0
        %2010 = vmatpush1.msra.mxu0 0.0
        %2011 = vmatprep.subr.mxu0 0.0
        %2012 = vmatpush1.msra.mxu0 0.0
        %2013 = vmatprep.subr.mxu0 0.0
        %2014 = vmatpush1.msra.mxu0 0.0
        %2015 = vmatprep.subr.mxu0 0.0
        %2016 = vmatpush1.msra.mxu0 0.0
        %2017 = vmatprep.subr.mxu0 0.0
        %2018 = vmatpush1.msra.mxu0 0.0
        %2019 = vmatprep.subr.mxu0 0.0
        %2020 = vmatpush1.msra.mxu0 0.0
        %2021 = vmatprep.subr.mxu0 0.0
        %2022 = vmatpush1.msra.mxu0 0.0
        %2023 = vmatprep.subr.mxu0 0.0
        %2024 = vmatpush1.msra.mxu0 0.0
        %2025 = vmatprep.subr.mxu0 0.0
        %2026 = vmatpush1.msra.mxu0 0.0
        %2027 = vmatprep.subr.mxu0 0.0
        %2028 = vmatpush1.msra.mxu0 0.0
        %2029 = vmatprep.subr.mxu0 0.0
        %2030 = vmatpush1.msra.mxu0 0.0
        %2031 = vmatprep.subr.mxu0 0.0
        %2032 = vmatpush1.msra.mxu0 0.0
        %2033 = vmatprep.subr.mxu0 0.0
        %2034 = vmatpush1.msra.mxu0 0.0
        %2035 = vmatprep.subr.mxu0 0.0
        %2036 = vmatpush1.msra.mxu0 0.0
        %2037 = vmatprep.subr.mxu0 0.0
        %2038 = vmatpush1.msra.mxu0 0.0
        %2039 = vmatprep.mubr.f32.mxu0 0.0
        %2040 = vmatmul.mubr.f32.gmra.mrb[0].mxu0 %v1903
        %v2041 = vpop.f32.mrb[0].mxu0
        %v2042 = vadd.f32 %v1972, %v2041
        %v2043 = vpop.f32.mrb[0].mxu0
        %2044 = vdwg.mxu0
        %vm2045 = vcmask 24576
        %2046 = vst.msk [vmem:[%s493] sm:$0x1] %vm2045, %v2042
        %p2047 = scmp.lt.s32.totalorder %s27, 1
        %s2048 = scalar_select %p2047, %s27, 1
        %s2049 = scalar_lea.vmem %s12, %s2048
        // Predicated region
        $region93: #{forward.1} parent=67 // pred_check
          %p2050 = pneg %p302
        $region94: #{forward.1} parent=67 // pred_check_branch
          %2052 = sbr.rel (%p2050) target = $region96
        $region95: #{forward.1} parent=67 // pred_region
          _
        $region96: #{forward.1} parent=67 // pred_fallthru
          _
      $region68: #{forward.1} parent=5 // pred_fallthru
        _
      %p2053 = scmp.le.s32.totalorder 2, %s22
      // Predicated region
      $region97: #{forward.1} parent=5 // pred_check
        %p2054 = pneg %p2053
      $region98: #{forward.1} parent=5 // pred_check_branch
        %2056 = sbr.rel (%p2054) target = $region100
      $region99: #{forward.1} parent=5 // pred_region
        %s2057 = ssub.s32 %s22, 2
        // Predicated region
        $region101: #{forward.1} parent=99 // pred_check
          %p2058 = pneg %p308
        $region102: #{forward.1} parent=99 // pred_check_branch
          %2060 = sbr.rel (%p2058) target = $region104
        $region103: #{forward.1} parent=99 // pred_region
          %p2061 = scmp.lt.s32.totalorder %s28, 1
          %s2062 = scalar_select %p2061, %s28, 1
          %s2063 = scalar_lea.vmem %s12, %s2062
        $region104: #{forward.1} parent=99 // pred_fallthru
          _
      $region100: #{forward.1} parent=5 // pred_fallthru
        _
    $region6: #{forward.1} parent=1 // loop_footer
      %s26 = sadd.s32 1, %s22
    $region7: #{forward.1} parent=1 // loop_footer_branch
      %21 = sbr.rel target = $region3
    $region8: #{forward.1} parent=1 // loop_exit
      _
    %2064 = vsyncpa [#allocation3], 1
    %s2065 = scalar_lea.sflag [#allocation3], 1
    %2066 = vsyncpa %s2065, 1
    %2067 = vsyncpa [#allocation5], 1
    %2068 = vsyncpa [#allocation8], 1
    %2069 = vsyncpa [#allocation11], 1

</llo_original>
